<compile_context>
chip_gen: v7x
topology: tpu7x:2x2x1
jax: 0.10.0
libtpu: 0.0.40
codegen_flags: <defaults>
</compile_context>

<pallas_src>
import functools

import jax
import jax.numpy as jnp
from jax import lax
from jax.experimental import pallas as pl
from jax.experimental.pallas import tpu as pltpu

LANE = 128  # head output padded to a lane-dense width


# ----------------------------------------------------------------------------
# Fused Pallas kernel: conv-matmul + ReLU + flatten + 2-layer MLP head
# ----------------------------------------------------------------------------
def _fused_forward_impl(patches_t, conv_wf, conv_b, w1, b1, w2p, b2p,
                        *, n, c_out, hw):
    feat_dim = c_out * hw
    k_pad = w2p.shape[1]

    def kernel(pt_ref, wcf_ref, bc_ref, w1_ref, b1_ref, w2_ref, b2_ref,
               o_ref, feat_sc):
        # Conv2d(3x3, pad=1) as one matmul, output channel-major:
        #   (C_out, kh*kw*C_in) @ (kh*kw*C_in, N*H*W) -> (C_out, N*H*W)
        conv = jnp.dot(wcf_ref[...], pt_ref[...],
                       preferred_element_type=jnp.float32)
        feat_t = jnp.maximum(conv + bc_ref[...], 0.0)

        # Flatten into torch's NCHW order:
        #   feat[n, c*H*W + p] = feat_t[c, n*H*W + p]
        # N*C_out small, lane-aligned (multiples of 256) stores; the
        # activation stays in VMEM.
        for nn in range(n):
            for c in range(c_out):
                feat_sc[nn:nn + 1, c * hw:(c + 1) * hw] = \
                    feat_t[c:c + 1, nn * hw:(nn + 1) * hw]

        # Two-layer head: bf16 operands, f32 accumulation.
        feat = feat_sc[...].astype(jnp.bfloat16)          # (N, 2048)
        h = jnp.dot(feat, w1_ref[...], preferred_element_type=jnp.float32)
        h = jnp.maximum(h + b1_ref[...], 0.0).astype(jnp.bfloat16)
        out = jnp.dot(h, w2_ref[...], preferred_element_type=jnp.float32)
        o_ref[...] = out + b2_ref[...]                    # (N, 128) lane-dense

    vmem = pl.BlockSpec(memory_space=pltpu.MemorySpace.VMEM)
    return pl.pallas_call(
        kernel,
        out_shape=jax.ShapeDtypeStruct((n, k_pad), jnp.float32),
        in_specs=[vmem] * 7,
        out_specs=vmem,
        scratch_shapes=[pltpu.VMEM((n, feat_dim), jnp.float32)],
    )(patches_t, conv_wf, conv_b, w1, b1, w2p, b2p)


@jax.jit
def _fused_forward(x, conv_wf, conv_b, w1, b1, w2p, b2p):
    n, c_in, h, w = x.shape
    c_out = conv_b.shape[0]
    # Patch extraction (im2col) built directly in the (kh*kw*C_in, N*H*W)
    # orientation the kernel consumes — one tiny fused XLA op, no post-hoc
    # transpose/reshape of the activation anywhere in the hot path.
    xp = jnp.pad(x, ((0, 0), (0, 0), (1, 1), (1, 1)))
    taps = [xp[:, :, di:di + h, dj:dj + w]
            for di in range(3) for dj in range(3)]         # 9 x (N, C, H, W)
    pt = jnp.stack(taps, axis=0)                           # (9, N, C, H, W)
    pt = pt.transpose(0, 2, 1, 3, 4).reshape(9 * c_in, n * h * w)
    return _fused_forward_impl(pt, conv_wf, conv_b, w1, b1, w2p, b2p,
                               n=n, c_out=c_out, hw=h * w)


# ----------------------------------------------------------------------------
# Gradient reversal (identity forward, -alpha * grad backward)
# ----------------------------------------------------------------------------
@functools.partial(jax.custom_vjp, nondiff_argnums=(1,))
def reverse_layer(x, alpha):
    # ReverseLayerF: identity in the forward pass, so the fused Pallas forward
    # above is semantically identical for inference.
    # TODO(synk): pallas_call has no automatic VJP — to train (and actually use
    # this reversal), wrap _fused_forward in a custom_vjp with backward kernels
    # or a pure-JAX backward.
    return x


def _rev_fwd(x, alpha):
    return x, None


def _rev_bwd(alpha, _, g):
    return (-alpha * g,)


reverse_layer.defvjp(_rev_fwd, _rev_bwd)


# ----------------------------------------------------------------------------
# Parameters (synthetic, PyTorch layout) and one-time kernel re-layout
# ----------------------------------------------------------------------------
def init_params(key, c_in=4, c_feat=8, h=16, w=16, hidden=64,
                n_classes=10, n_domains=2):
    """Synthetic parameters in PyTorch layout (Conv2d OIHW, Linear (in, out))."""
    feat_dim = c_feat * h * w
    ks = jax.random.split(key, 10)
    return {
        "conv_w": 0.1 * jax.random.normal(ks[0], (c_feat, c_in, 3, 3), jnp.float32),
        "conv_b": 0.1 * jax.random.normal(ks[1], (c_feat,), jnp.float32),
        "cls_w1": 0.05 * jax.random.normal(ks[2], (feat_dim, hidden), jnp.float32),
        "cls_b1": 0.05 * jax.random.normal(ks[3], (hidden,), jnp.float32),
        "cls_w2": 0.05 * jax.random.normal(ks[4], (hidden, n_classes), jnp.float32),
        "cls_b2": 0.05 * jax.random.normal(ks[5], (n_classes,), jnp.float32),
        "dann_w1": 0.05 * jax.random.normal(ks[6], (feat_dim, hidden), jnp.float32),
        "dann_b1": 0.05 * jax.random.normal(ks[7], (hidden,), jnp.float32),
        "dann_w2": 0.05 * jax.random.normal(ks[8], (hidden, n_domains), jnp.float32),
        "dann_b2": 0.05 * jax.random.normal(ks[9], (n_domains,), jnp.float32),
    }


def prepare_params(p):
    """One-time re-layout of torch-format params for the fused kernel."""
    c_out, c_in = p["conv_w"].shape[:2]
    hidden = p["cls_w1"].shape[1]

    def pad_head(w2, b2):
        k = w2.shape[1]
        w2p = jnp.zeros((hidden, LANE), jnp.float32).at[:, :k].set(w2)
        b2p = jnp.zeros((1, LANE), jnp.float32).at[0, :k].set(b2)
        return w2p.astype(jnp.bfloat16), b2p, k

    cls_w2p, cls_b2p, cls_k = pad_head(p["cls_w2"], p["cls_b2"])
    dann_w2p, dann_b2p, dann_k = pad_head(p["dann_w2"], p["dann_b2"])

    return {
        # (C_out, kh*kw*C_in), tap-major / c_in-minor — matches the patch rows.
        "conv_wf": p["conv_w"].transpose(0, 2, 3, 1).reshape(c_out, 9 * c_in),
        "conv_b": p["conv_b"].reshape(c_out, 1),
        # W1 rows are already in torch's NCHW flatten order (c*H*W + h*W + w),
        # which is exactly the order the kernel writes the feature scratch in,
        # so no permutation is needed.
        "cls_w1": p["cls_w1"].astype(jnp.bfloat16),
        "cls_b1": p["cls_b1"].reshape(1, hidden),
        "cls_w2p": cls_w2p, "cls_b2p": cls_b2p, "cls_k": cls_k,
        "dann_w1": p["dann_w1"].astype(jnp.bfloat16),
        "dann_b1": p["dann_b1"].reshape(1, hidden),
        "dann_w2p": dann_w2p, "dann_b2p": dann_b2p, "dann_k": dann_k,
    }


# ----------------------------------------------------------------------------
# Forward pass (matches RandomNetworkWithReverseGrad.forward semantics)
# ----------------------------------------------------------------------------
def forward(prepared, x, alpha=None):
    if alpha is not None:
        # gradient-reversal (DANN) branch; reversal is identity in the forward
        out = _fused_forward(x, prepared["conv_wf"], prepared["conv_b"],
                             prepared["dann_w1"], prepared["dann_b1"],
                             prepared["dann_w2p"], prepared["dann_b2p"])
        return out[:, :prepared["dann_k"]]
    out = _fused_forward(x, prepared["conv_wf"], prepared["conv_b"],
                         prepared["cls_w1"], prepared["cls_b1"],
                         prepared["cls_w2p"], prepared["cls_b2p"])
    return out[:, :prepared["cls_k"]]


# ----------------------------------------------------------------------------
# Pure-JAX f32 reference (for verification)
# ----------------------------------------------------------------------------
def reference_forward(p, x, alpha=None):
    conv = lax.conv_general_dilated(
        x, p["conv_w"], window_strides=(1, 1), padding=((1, 1), (1, 1)),
        dimension_numbers=("NCHW", "OIHW", "NCHW"))
    feat = jnp.maximum(conv + p["conv_b"][None, :, None, None], 0.0)
    feat = feat.reshape(x.shape[0], -1)
    if alpha is not None:
        w1, b1, w2, b2 = p["dann_w1"], p["dann_b1"], p["dann_w2"], p["dann_b2"]
    else:
        w1, b1, w2, b2 = p["cls_w1"], p["cls_b1"], p["cls_w2"], p["cls_b2"]
    h = jnp.maximum(feat @ w1 + b1, 0.0)
    return h @ w2 + b2


# ----------------------------------------------------------------------------
if __name__ == "__main__":
    key = jax.random.PRNGKey(0)
    k_param, k_x = jax.random.split(key)

    N, C, H, W = 2, 4, 16, 16
    torch_params = init_params(k_param, c_in=C, c_feat=8, h=H, w=W)
    prepared = prepare_params(torch_params)
    x = jax.random.normal(k_x, (N, C, H, W), jnp.float32)

    # classifier branch (alpha is None)
    cls_out = jax.block_until_ready(forward(prepared, x, alpha=None))
    assert cls_out.shape == (N, 10), cls_out.shape

    # domain-adversarial branch (alpha given -> gradient-reversal path)
    dann_out = jax.block_until_ready(forward(prepared, x, alpha=1.0))
    assert dann_out.shape == (N, 2), dann_out.shape

    # verify against a pure-JAX f32 reference (head matmuls run in bf16)
    cls_ref = reference_forward(torch_params, x, alpha=None)
    dann_ref = reference_forward(torch_params, x, alpha=1.0)
    assert jnp.allclose(cls_out, cls_ref, rtol=2e-2, atol=2e-2)
    assert jnp.allclose(dann_out, dann_ref, rtol=2e-2, atol=2e-2)

    print("KERNEL_OK")
</pallas_src>

<mosaic_0001>
module attributes {stable_mosaic.version = 11 : i64} {
  func.func @kernel(%arg0: memref<36x512xf32, #tpu.memory_space<vmem>>, %arg1: memref<8x36xf32, #tpu.memory_space<vmem>>, %arg2: memref<8x1xf32, #tpu.memory_space<vmem>>, %arg3: memref<2048x64xbf16, #tpu.memory_space<vmem>>, %arg4: memref<1x64xf32, #tpu.memory_space<vmem>>, %arg5: memref<64x128xbf16, #tpu.memory_space<vmem>>, %arg6: memref<1x128xf32, #tpu.memory_space<vmem>>, %arg7: memref<2x128xf32, #tpu.memory_space<vmem>>, %arg8: memref<2x2048xf32, #tpu.memory_space<vmem>>) attributes {dimension_semantics = [], scalar_prefetch = 0 : i64, scratch_operands = 1 : i64, tpu.core_type = #tpu.core_type<tc>} {
    %c0 = arith.constant 0 : index
    %c0_0 = arith.constant 0 : index
    %0 = vector.load %arg1[%c0, %c0_0] : memref<8x36xf32, #tpu.memory_space<vmem>>, vector<8x36xf32>
    %c0_1 = arith.constant 0 : index
    %c0_2 = arith.constant 0 : index
    %1 = vector.load %arg0[%c0_1, %c0_2] : memref<36x512xf32, #tpu.memory_space<vmem>>, vector<36x512xf32>
    %cst = arith.constant dense<0.000000e+00> : vector<8x512xf32>
    %2 = tpu.matmul %0, %1, %cst {dimension_numbers = #tpu.dot_dimension_numbers<[1], [0], [0], [1], [0, 0, 1, 1], [], []>} : vector<8x36xf32>, vector<36x512xf32>, vector<8x512xf32> -> vector<8x512xf32>
    %c0_3 = arith.constant 0 : index
    %c0_4 = arith.constant 0 : index
    %3 = vector.load %arg2[%c0_3, %c0_4] : memref<8x1xf32, #tpu.memory_space<vmem>>, vector<8x1xf32>
    %4 = vector.broadcast %3 : vector<8x1xf32> to vector<8x512xf32>
    %5 = arith.addf %2, %4 : vector<8x512xf32>
    %cst_5 = arith.constant 0.000000e+00 : f32
    %6 = vector.broadcast %cst_5 : f32 to vector<8x512xf32>
    %7 = arith.maximumf %5, %6 : vector<8x512xf32>
    %8 = vector.extract_strided_slice %7 {offsets = [0, 0], sizes = [1, 256], strides = [1, 1]} : vector<8x512xf32> to vector<1x256xf32>
    %c0_6 = arith.constant 0 : index
    %c0_7 = arith.constant 0 : index
    %9 = vector.load %arg8[%c0_6, %c0_7] : memref<2x2048xf32, #tpu.memory_space<vmem>>, vector<1x256xf32>
    tpu.vector_store %arg8[%c0_6, %c0_7], %8 {strides = array<i32>} : memref<2x2048xf32, #tpu.memory_space<vmem>>, vector<1x256xf32>,
    %10 = vector.extract_strided_slice %7 {offsets = [1, 0], sizes = [1, 256], strides = [1, 1]} : vector<8x512xf32> to vector<1x256xf32>
    %c0_8 = arith.constant 0 : index
    %c256 = arith.constant 256 : index
    %11 = vector.load %arg8[%c0_8, %c256] : memref<2x2048xf32, #tpu.memory_space<vmem>>, vector<1x256xf32>
    tpu.vector_store %arg8[%c0_8, %c256], %10 {strides = array<i32>} : memref<2x2048xf32, #tpu.memory_space<vmem>>, vector<1x256xf32>,
    %12 = vector.extract_strided_slice %7 {offsets = [2, 0], sizes = [1, 256], strides = [1, 1]} : vector<8x512xf32> to vector<1x256xf32>
    %c0_9 = arith.constant 0 : index
    %c512 = arith.constant 512 : index
    %13 = vector.load %arg8[%c0_9, %c512] : memref<2x2048xf32, #tpu.memory_space<vmem>>, vector<1x256xf32>
    tpu.vector_store %arg8[%c0_9, %c512], %12 {strides = array<i32>} : memref<2x2048xf32, #tpu.memory_space<vmem>>, vector<1x256xf32>,
    %14 = vector.extract_strided_slice %7 {offsets = [3, 0], sizes = [1, 256], strides = [1, 1]} : vector<8x512xf32> to vector<1x256xf32>
    %c0_10 = arith.constant 0 : index
    %c768 = arith.constant 768 : index
    %15 = vector.load %arg8[%c0_10, %c768] : memref<2x2048xf32, #tpu.memory_space<vmem>>, vector<1x256xf32>
    tpu.vector_store %arg8[%c0_10, %c768], %14 {strides = array<i32>} : memref<2x2048xf32, #tpu.memory_space<vmem>>, vector<1x256xf32>,
    %16 = vector.extract_strided_slice %7 {offsets = [4, 0], sizes = [1, 256], strides = [1, 1]} : vector<8x512xf32> to vector<1x256xf32>
    %c0_11 = arith.constant 0 : index
    %c1024 = arith.constant 1024 : index
    %17 = vector.load %arg8[%c0_11, %c1024] : memref<2x2048xf32, #tpu.memory_space<vmem>>, vector<1x256xf32>
    tpu.vector_store %arg8[%c0_11, %c1024], %16 {strides = array<i32>} : memref<2x2048xf32, #tpu.memory_space<vmem>>, vector<1x256xf32>,
    %18 = vector.extract_strided_slice %7 {offsets = [5, 0], sizes = [1, 256], strides = [1, 1]} : vector<8x512xf32> to vector<1x256xf32>
    %c0_12 = arith.constant 0 : index
    %c1280 = arith.constant 1280 : index
    %19 = vector.load %arg8[%c0_12, %c1280] : memref<2x2048xf32, #tpu.memory_space<vmem>>, vector<1x256xf32>
    tpu.vector_store %arg8[%c0_12, %c1280], %18 {strides = array<i32>} : memref<2x2048xf32, #tpu.memory_space<vmem>>, vector<1x256xf32>,
    %20 = vector.extract_strided_slice %7 {offsets = [6, 0], sizes = [1, 256], strides = [1, 1]} : vector<8x512xf32> to vector<1x256xf32>
    %c0_13 = arith.constant 0 : index
    %c1536 = arith.constant 1536 : index
    %21 = vector.load %arg8[%c0_13, %c1536] : memref<2x2048xf32, #tpu.memory_space<vmem>>, vector<1x256xf32>
    tpu.vector_store %arg8[%c0_13, %c1536], %20 {strides = array<i32>} : memref<2x2048xf32, #tpu.memory_space<vmem>>, vector<1x256xf32>,
    %22 = vector.extract_strided_slice %7 {offsets = [7, 0], sizes = [1, 256], strides = [1, 1]} : vector<8x512xf32> to vector<1x256xf32>
    %c0_14 = arith.constant 0 : index
    %c1792 = arith.constant 1792 : index
    %23 = vector.load %arg8[%c0_14, %c1792] : memref<2x2048xf32, #tpu.memory_space<vmem>>, vector<1x256xf32>
    tpu.vector_store %arg8[%c0_14, %c1792], %22 {strides = array<i32>} : memref<2x2048xf32, #tpu.memory_space<vmem>>, vector<1x256xf32>,
    %24 = vector.extract_strided_slice %7 {offsets = [0, 256], sizes = [1, 256], strides = [1, 1]} : vector<8x512xf32> to vector<1x256xf32>
    %c1 = arith.constant 1 : index
    %c0_15 = arith.constant 0 : index
    %25 = vector.load %arg8[%c1, %c0_15] : memref<2x2048xf32, #tpu.memory_space<vmem>>, vector<1x256xf32>
    tpu.vector_store %arg8[%c1, %c0_15], %24 {strides = array<i32>} : memref<2x2048xf32, #tpu.memory_space<vmem>>, vector<1x256xf32>,
    %26 = vector.extract_strided_slice %7 {offsets = [1, 256], sizes = [1, 256], strides = [1, 1]} : vector<8x512xf32> to vector<1x256xf32>
    %c1_16 = arith.constant 1 : index
    %c256_17 = arith.constant 256 : index
    %27 = vector.load %arg8[%c1_16, %c256_17] : memref<2x2048xf32, #tpu.memory_space<vmem>>, vector<1x256xf32>
    tpu.vector_store %arg8[%c1_16, %c256_17], %26 {strides = array<i32>} : memref<2x2048xf32, #tpu.memory_space<vmem>>, vector<1x256xf32>,
    %28 = vector.extract_strided_slice %7 {offsets = [2, 256], sizes = [1, 256], strides = [1, 1]} : vector<8x512xf32> to vector<1x256xf32>
    %c1_18 = arith.constant 1 : index
    %c512_19 = arith.constant 512 : index
    %29 = vector.load %arg8[%c1_18, %c512_19] : memref<2x2048xf32, #tpu.memory_space<vmem>>, vector<1x256xf32>
    tpu.vector_store %arg8[%c1_18, %c512_19], %28 {strides = array<i32>} : memref<2x2048xf32, #tpu.memory_space<vmem>>, vector<1x256xf32>,
    %30 = vector.extract_strided_slice %7 {offsets = [3, 256], sizes = [1, 256], strides = [1, 1]} : vector<8x512xf32> to vector<1x256xf32>
    %c1_20 = arith.constant 1 : index
    %c768_21 = arith.constant 768 : index
    %31 = vector.load %arg8[%c1_20, %c768_21] : memref<2x2048xf32, #tpu.memory_space<vmem>>, vector<1x256xf32>
    tpu.vector_store %arg8[%c1_20, %c768_21], %30 {strides = array<i32>} : memref<2x2048xf32, #tpu.memory_space<vmem>>, vector<1x256xf32>,
    %32 = vector.extract_strided_slice %7 {offsets = [4, 256], sizes = [1, 256], strides = [1, 1]} : vector<8x512xf32> to vector<1x256xf32>
    %c1_22 = arith.constant 1 : index
    %c1024_23 = arith.constant 1024 : index
    %33 = vector.load %arg8[%c1_22, %c1024_23] : memref<2x2048xf32, #tpu.memory_space<vmem>>, vector<1x256xf32>
    tpu.vector_store %arg8[%c1_22, %c1024_23], %32 {strides = array<i32>} : memref<2x2048xf32, #tpu.memory_space<vmem>>, vector<1x256xf32>,
    %34 = vector.extract_strided_slice %7 {offsets = [5, 256], sizes = [1, 256], strides = [1, 1]} : vector<8x512xf32> to vector<1x256xf32>
    %c1_24 = arith.constant 1 : index
    %c1280_25 = arith.constant 1280 : index
    %35 = vector.load %arg8[%c1_24, %c1280_25] : memref<2x2048xf32, #tpu.memory_space<vmem>>, vector<1x256xf32>
    tpu.vector_store %arg8[%c1_24, %c1280_25], %34 {strides = array<i32>} : memref<2x2048xf32, #tpu.memory_space<vmem>>, vector<1x256xf32>,
    %36 = vector.extract_strided_slice %7 {offsets = [6, 256], sizes = [1, 256], strides = [1, 1]} : vector<8x512xf32> to vector<1x256xf32>
    %c1_26 = arith.constant 1 : index
    %c1536_27 = arith.constant 1536 : index
    %37 = vector.load %arg8[%c1_26, %c1536_27] : memref<2x2048xf32, #tpu.memory_space<vmem>>, vector<1x256xf32>
    tpu.vector_store %arg8[%c1_26, %c1536_27], %36 {strides = array<i32>} : memref<2x2048xf32, #tpu.memory_space<vmem>>, vector<1x256xf32>,
    %38 = vector.extract_strided_slice %7 {offsets = [7, 256], sizes = [1, 256], strides = [1, 1]} : vector<8x512xf32> to vector<1x256xf32>
    %c1_28 = arith.constant 1 : index
    %c1792_29 = arith.constant 1792 : index
    %39 = vector.load %arg8[%c1_28, %c1792_29] : memref<2x2048xf32, #tpu.memory_space<vmem>>, vector<1x256xf32>
    tpu.vector_store %arg8[%c1_28, %c1792_29], %38 {strides = array<i32>} : memref<2x2048xf32, #tpu.memory_space<vmem>>, vector<1x256xf32>,
    %c0_30 = arith.constant 0 : index
    %c0_31 = arith.constant 0 : index
    %40 = vector.load %arg8[%c0_30, %c0_31] : memref<2x2048xf32, #tpu.memory_space<vmem>>, vector<2x2048xf32>
    %41 = arith.truncf %40 : vector<2x2048xf32> to vector<2x2048xbf16>
    %c0_32 = arith.constant 0 : index
    %c0_33 = arith.constant 0 : index
    %42 = vector.load %arg3[%c0_32, %c0_33] : memref<2048x64xbf16, #tpu.memory_space<vmem>>, vector<2048x64xbf16>
    %cst_34 = arith.constant dense<0.000000e+00> : vector<2x64xf32>
    %43 = tpu.matmul %41, %42, %cst_34 {dimension_numbers = #tpu.dot_dimension_numbers<[1], [0], [0], [1], [0, 0, 1, 1], [], []>} : vector<2x2048xbf16>, vector<2048x64xbf16>, vector<2x64xf32> -> vector<2x64xf32>
    %c0_35 = arith.constant 0 : index
    %c0_36 = arith.constant 0 : index
    %44 = vector.load %arg4[%c0_35, %c0_36] : memref<1x64xf32, #tpu.memory_space<vmem>>, vector<1x64xf32>
    %45 = vector.broadcast %44 : vector<1x64xf32> to vector<2x64xf32>
    %46 = arith.addf %43, %45 : vector<2x64xf32>
    %cst_37 = arith.constant 0.000000e+00 : f32
    %47 = vector.broadcast %cst_37 : f32 to vector<2x64xf32>
    %48 = arith.maximumf %46, %47 : vector<2x64xf32>
    %49 = arith.truncf %48 : vector<2x64xf32> to vector<2x64xbf16>
    %c0_38 = arith.constant 0 : index
    %c0_39 = arith.constant 0 : index
    %50 = vector.load %arg5[%c0_38, %c0_39] : memref<64x128xbf16, #tpu.memory_space<vmem>>, vector<64x128xbf16>
    %cst_40 = arith.constant dense<0.000000e+00> : vector<2x128xf32>
    %51 = tpu.matmul %49, %50, %cst_40 {dimension_numbers = #tpu.dot_dimension_numbers<[1], [0], [0], [1], [0, 0, 1, 1], [], []>} : vector<2x64xbf16>, vector<64x128xbf16>, vector<2x128xf32> -> vector<2x128xf32>
    %c0_41 = arith.constant 0 : index
    %c0_42 = arith.constant 0 : index
    %52 = vector.load %arg6[%c0_41, %c0_42] : memref<1x128xf32, #tpu.memory_space<vmem>>, vector<1x128xf32>
    %53 = vector.broadcast %52 : vector<1x128xf32> to vector<2x128xf32>
    %54 = arith.addf %51, %53 : vector<2x128xf32>
    %c0_43 = arith.constant 0 : index
    %c0_44 = arith.constant 0 : index
    %55 = vector.load %arg7[%c0_43, %c0_44] : memref<2x128xf32, #tpu.memory_space<vmem>>, vector<2x128xf32>
    tpu.vector_store %arg7[%c0_43, %c0_44], %54 {strides = array<i32>} : memref<2x128xf32, #tpu.memory_space<vmem>>, vector<2x128xf32>,
    return
  }
}

</mosaic_0001>

<llo_original>
// kernel: _fused_forward.1
$region0: #{_fused_forward.1}
  #allocation0 [shape = 'u32[]', space=smem, size = 0x4, offset = 0x4, fixed_abs, tag = 'smem constant byte address 0x4 - core index']
  #allocation1 [shape = 'u32[144,128]{1,0:T(1,128)}', space=vmem, size = 0x12000, scoped, tag = 'internal scratch']
  #allocation2 [shape = 'f32[2,2048]{1,0:T(2,128)}', space=vmem, size = 0x4000, scoped, tag = 'scratch operand']
  %s0 = inlined_call_operand.vmem [shape: f32[36,512], index: 0, kind: input, shape index: {}]
  %s1 = inlined_call_operand.vmem [shape: f32[8,36], index: 1, kind: input, shape index: {}]
  %s2 = inlined_call_operand.vmem [shape: f32[8,1], index: 2, kind: input, shape index: {}]
  %s3 = inlined_call_operand.vmem [shape: bf16[2048,64], index: 3, kind: input, shape index: {}]
  %s4 = inlined_call_operand.vmem [shape: f32[1,64], index: 4, kind: input, shape index: {}]
  %s5 = inlined_call_operand.vmem [shape: bf16[64,128], index: 5, kind: input, shape index: {}]
  %s6 = inlined_call_operand.vmem [shape: f32[1,128], index: 6, kind: input, shape index: {}]
  %s7 = inlined_call_operand.hbm [shape: f32[2,128], index: 7, kind: output, shape index: {}]
  %s8 = sld [smem:[#allocation0]]
  $region38: #{_fused_forward.1} parent=0
    _
  %s10 = ssub.s32 1, %s8
  %s11 = scalar_select 0, %s10, %s8
  $region1: #{_fused_forward.1} parent=0
    #allocation3 [shape = 'u8[1024]{0}', space=vmem, size = 0x400, scoped, tag = 'output window, operand 0, single buffered']
    #allocation4 [shape = 's32[1]{0}', space=sflag, size = 0x4, scoped, tag = 'scoped memory for _fused_forward.1']
    %12 = vsyncpa [#allocation4], 0
    // Predicated region
    $region2: #{_fused_forward.1} parent=1 // pred_check
      _
    $region3: #{_fused_forward.1} parent=1 // pred_check_branch
      %14 = sbr.rel (0) target = $region5
    $region4: #{_fused_forward.1} parent=1 // pred_region
      _
    $region5: #{_fused_forward.1} parent=1 // pred_fallthru
      _
    // Predicated region
    $region6: #{_fused_forward.1} parent=1 // pred_check
      _
    $region7: #{_fused_forward.1} parent=1 // pred_check_branch
      %16 = sbr.rel (0) target = $region9
    $region8: #{_fused_forward.1} parent=1 // pred_region
      _
    $region9: #{_fused_forward.1} parent=1 // pred_fallthru
      _
    // Predicated region
    $region10: #{_fused_forward.1} parent=1 // pred_check
      _
    $region11: #{_fused_forward.1} parent=1 // pred_check_branch
      %18 = sbr.rel (0) target = $region13
    $region12: #{_fused_forward.1} parent=1 // pred_region
      _
    $region13: #{_fused_forward.1} parent=1 // pred_fallthru
      _
    // Predicated region
    $region14: #{_fused_forward.1} parent=1 // pred_check
      _
    $region15: #{_fused_forward.1} parent=1 // pred_check_branch
      %20 = sbr.rel (0) target = $region17
    $region16: #{_fused_forward.1} parent=1 // pred_region
      _
    $region17: #{_fused_forward.1} parent=1 // pred_fallthru
      _
    // Predicated region
    $region18: #{_fused_forward.1} parent=1 // pred_check
      _
    $region19: #{_fused_forward.1} parent=1 // pred_check_branch
      %22 = sbr.rel (0) target = $region21
    $region20: #{_fused_forward.1} parent=1 // pred_region
      _
    $region21: #{_fused_forward.1} parent=1 // pred_fallthru
      _
    // Predicated region
    $region22: #{_fused_forward.1} parent=1 // pred_check
      _
    $region23: #{_fused_forward.1} parent=1 // pred_check_branch
      %24 = sbr.rel (0) target = $region25
    $region24: #{_fused_forward.1} parent=1 // pred_region
      _
    $region25: #{_fused_forward.1} parent=1 // pred_fallthru
      _
    // Predicated region
    $region26: #{_fused_forward.1} parent=1 // pred_check
      _
    $region27: #{_fused_forward.1} parent=1 // pred_check_branch
      %26 = sbr.rel (0) target = $region29
    $region28: #{_fused_forward.1} parent=1 // pred_region
      _
    $region29: #{_fused_forward.1} parent=1 // pred_fallthru
      _
    %v28 = vld [vmem:[%s1] sm:$0xff]
    %v29 = vld [vmem:[%s0] sm:$0xff]
    %v30 = vld [vmem:[%s0 + $0x8] sm:$0xff]
    %v31 = vld [vmem:[%s0 + $0x10] sm:$0xff]
    %v32 = vld [vmem:[%s0 + $0x18] sm:$0xff]
    %v33 = vld [vmem:[%s0 + $0x20] sm:$0xff]
    %v34 = vld [vmem:[%s0 + $0x28] sm:$0xff]
    %v35 = vld [vmem:[%s0 + $0x30] sm:$0xff]
    %v36 = vld [vmem:[%s0 + $0x38] sm:$0xff]
    %v37 = vld [vmem:[%s0 + $0x40] sm:$0xff]
    %v38 = vld [vmem:[%s0 + $0x48] sm:$0xff]
    %v39 = vld [vmem:[%s0 + $0x50] sm:$0xff]
    %v40 = vld [vmem:[%s0 + $0x58] sm:$0xff]
    %v41 = vld [vmem:[%s0 + $0x60] sm:$0xff]
    %v42 = vld [vmem:[%s0 + $0x68] sm:$0xff]
    %v43 = vld [vmem:[%s0 + $0x70] sm:$0xff]
    %v44 = vld [vmem:[%s0 + $0x78] sm:$0xff]
    %v45 = vld [vmem:[%s0 + $0x80] sm:$0xf]
    %v46 = vld [vmem:[%s0 + $0x88] sm:$0xf]
    %v47 = vld [vmem:[%s0 + $0x90] sm:$0xf]
    %v48 = vld [vmem:[%s0 + $0x98] sm:$0xf]
    %v49 = vld [vmem:[%s2] sm:$0xff]
    %51 = vset.pattern.permute.xlu0 0
    %52 = vperm.xlu0 %51, %v49
    %v53 = vpop.permute.xlu0 %52
    %vm55 = vcmask 293888
    %v57 = vsel %vm55, %v28, 0
    %vm59 = vcmask 1043456
    %v61 = vsel %vm59, %v45, 0
    %v64 = vsel %vm59, %v46, 0
    %v67 = vsel %vm59, %v47, 0
    %v70 = vsel %vm59, %v48, 0
    %72 = vmatprep.subr.mxu0 %v30
    %73 = vmatpush1.msra.mxu0 %v29
    %74 = vmatprep.subr.mxu0 %v34
    %75 = vmatpush1.msra.mxu0 %v33
    %76 = vmatprep.subr.mxu0 %v38
    %77 = vmatpush1.msra.mxu0 %v37
    %78 = vmatprep.subr.mxu0 %v42
    %79 = vmatpush1.msra.mxu0 %v41
    %80 = vmatprep.subr.mxu0 %v64
    %81 = vmatpush1.msra.mxu0 %v61
    %82 = vmatprep.subr.mxu0 0.0
    %83 = vmatpush1.msra.mxu0 0.0
    %84 = vmatprep.subr.mxu0 0.0
    %85 = vmatpush1.msra.mxu0 0.0
    %86 = vmatprep.subr.mxu0 0.0
    %87 = vmatpush1.msra.mxu0 0.0
    %88 = vmatprep.subr.mxu0 0.0
    %89 = vmatpush1.msra.mxu0 0.0
    %90 = vmatprep.subr.mxu0 0.0
    %91 = vmatpush1.msra.mxu0 0.0
    %92 = vmatprep.subr.mxu0 0.0
    %93 = vmatpush1.msra.mxu0 0.0
    %94 = vmatprep.subr.mxu0 0.0
    %95 = vmatpush1.msra.mxu0 0.0
    %96 = vmatprep.subr.mxu0 0.0
    %97 = vmatpush1.msra.mxu0 0.0
    %98 = vmatprep.subr.mxu0 0.0
    %99 = vmatpush1.msra.mxu0 0.0
    %100 = vmatprep.subr.mxu0 0.0
    %101 = vmatpush1.msra.mxu0 0.0
    %102 = vmatprep.subr.mxu0 0.0
    %103 = vmatpush1.msra.mxu0 0.0
    %104 = vmatprep.subr.mxu0 0.0
    %105 = vmatpush1.msra.mxu0 0.0
    %106 = vmatprep.subr.mxu0 0.0
    %107 = vmatpush1.msra.mxu0 0.0
    %108 = vmatprep.subr.mxu0 0.0
    %109 = vmatpush1.msra.mxu0 0.0
    %110 = vmatprep.subr.mxu0 0.0
    %111 = vmatpush1.msra.mxu0 0.0
    %112 = vmatprep.subr.mxu0 0.0
    %113 = vmatpush1.msra.mxu0 0.0
    %114 = vmatprep.subr.mxu0 0.0
    %115 = vmatpush1.msra.mxu0 0.0
    %116 = vmatprep.subr.mxu0 0.0
    %117 = vmatpush1.msra.mxu0 0.0
    %118 = vmatprep.subr.mxu0 0.0
    %119 = vmatpush1.msra.mxu0 0.0
    %120 = vmatprep.subr.mxu0 0.0
    %121 = vmatpush1.msra.mxu0 0.0
    %122 = vmatprep.subr.mxu0 0.0
    %123 = vmatpush1.msra.mxu0 0.0
    %124 = vmatprep.subr.mxu0 0.0
    %125 = vmatpush1.msra.mxu0 0.0
    %126 = vmatprep.subr.mxu0 0.0
    %127 = vmatpush1.msra.mxu0 0.0
    %128 = vmatprep.subr.mxu0 0.0
    %129 = vmatpush1.msra.mxu0 0.0
    %130 = vmatprep.subr.mxu0 0.0
    %131 = vmatpush1.msra.mxu0 0.0
    %132 = vmatprep.subr.mxu0 0.0
    %133 = vmatpush1.msra.mxu0 0.0
    %134 = vmatprep.subr.mxu0 0.0
    %135 = vmatpush1.msra.mxu0 0.0
    %136 = vmatprep.mubr.f32.mxu0 0.0
    %137 = vmatmul.mubr.f32.gmra.mrb[0].mxu0 %v57
    %v138 = vpop.f32.mrb[0].mxu0
    %v139 = vadd.f32 %v53, %v138
    %v140 = vpop.f32.mrb[0].mxu0
    %v141 = vadd.f32 %v53, %v140
    %142 = vdwg.mxu0
    %143 = vmatprep.subr.mxu0 %v32
    %144 = vmatpush1.msra.mxu0 %v31
    %145 = vmatprep.subr.mxu0 %v36
    %146 = vmatpush1.msra.mxu0 %v35
    %147 = vmatprep.subr.mxu0 %v40
    %148 = vmatpush1.msra.mxu0 %v39
    %149 = vmatprep.subr.mxu0 %v44
    %150 = vmatpush1.msra.mxu0 %v43
    %151 = vmatprep.subr.mxu0 %v70
    %152 = vmatpush1.msra.mxu0 %v67
    %153 = vmatprep.subr.mxu0 0.0
    %154 = vmatpush1.msra.mxu0 0.0
    %155 = vmatprep.subr.mxu0 0.0
    %156 = vmatpush1.msra.mxu0 0.0
    %157 = vmatprep.subr.mxu0 0.0
    %158 = vmatpush1.msra.mxu0 0.0
    %159 = vmatprep.subr.mxu0 0.0
    %160 = vmatpush1.msra.mxu0 0.0
    %161 = vmatprep.subr.mxu0 0.0
    %162 = vmatpush1.msra.mxu0 0.0
    %163 = vmatprep.subr.mxu0 0.0
    %164 = vmatpush1.msra.mxu0 0.0
    %165 = vmatprep.subr.mxu0 0.0
    %166 = vmatpush1.msra.mxu0 0.0
    %167 = vmatprep.subr.mxu0 0.0
    %168 = vmatpush1.msra.mxu0 0.0
    %169 = vmatprep.subr.mxu0 0.0
    %170 = vmatpush1.msra.mxu0 0.0
    %171 = vmatprep.subr.mxu0 0.0
    %172 = vmatpush1.msra.mxu0 0.0
    %173 = vmatprep.subr.mxu0 0.0
    %174 = vmatpush1.msra.mxu0 0.0
    %175 = vmatprep.subr.mxu0 0.0
    %176 = vmatpush1.msra.mxu0 0.0
    %177 = vmatprep.subr.mxu0 0.0
    %178 = vmatpush1.msra.mxu0 0.0
    %179 = vmatprep.subr.mxu0 0.0
    %180 = vmatpush1.msra.mxu0 0.0
    %181 = vmatprep.subr.mxu0 0.0
    %182 = vmatpush1.msra.mxu0 0.0
    %183 = vmatprep.subr.mxu0 0.0
    %184 = vmatpush1.msra.mxu0 0.0
    %185 = vmatprep.subr.mxu0 0.0
    %186 = vmatpush1.msra.mxu0 0.0
    %187 = vmatprep.subr.mxu0 0.0
    %188 = vmatpush1.msra.mxu0 0.0
    %189 = vmatprep.subr.mxu0 0.0
    %190 = vmatpush1.msra.mxu0 0.0
    %191 = vmatprep.subr.mxu0 0.0
    %192 = vmatpush1.msra.mxu0 0.0
    %193 = vmatprep.subr.mxu0 0.0
    %194 = vmatpush1.msra.mxu0 0.0
    %195 = vmatprep.subr.mxu0 0.0
    %196 = vmatpush1.msra.mxu0 0.0
    %197 = vmatprep.subr.mxu0 0.0
    %198 = vmatpush1.msra.mxu0 0.0
    %199 = vmatprep.subr.mxu0 0.0
    %200 = vmatpush1.msra.mxu0 0.0
    %201 = vmatprep.subr.mxu0 0.0
    %202 = vmatpush1.msra.mxu0 0.0
    %203 = vmatprep.subr.mxu0 0.0
    %204 = vmatpush1.msra.mxu0 0.0
    %205 = vmatprep.subr.mxu0 0.0
    %206 = vmatpush1.msra.mxu0 0.0
    %207 = vmatprep.mubr.f32.mxu0 0.0
    %208 = vmatmul.mubr.f32.gmra.mrb[0].mxu0 %v57
    %v209 = vpop.f32.mrb[0].mxu0
    %v210 = vadd.f32 %v53, %v209
    %v211 = vpop.f32.mrb[0].mxu0
    %v212 = vadd.f32 %v53, %v211
    %213 = vdwg.mxu0
    %v214 = vmax.f32 %v139, 0.0
    %v215 = vmax.f32 %v141, 0.0
    %v216 = vmax.f32 %v210, 0.0
    %v217 = vmax.f32 %v212, 0.0
    %v220 = vcombine.low %v214, %v215
    %v222 = vunpack.c.l.s4 1966171168
    %v223 = vunpack.c.0.s8 %v222
    %v224 = vlaneseq
    %v225 = vshrl.u32 %v224, 7
    %v226 = vsub.s32 %v223, %v225
    %v227 = vrot.slane %v220, %v226
    %v229 = vunpack.c.l.s4 1966171168
    %v230 = vunpack.c.0.s8 %v229
    %v231 = vlaneseq
    %v232 = vshrl.u32 %v231, 7
    %v233 = vsub.s32 %v230, %v232
    %v234 = vrot.slane %v227, %v233
    %v236 = vlaneseq
    %vm237 = vcmp.ge.s32.totalorder %v236, 0
    %vm238 = vcmp.lt.s32.totalorder %v236, 256
    %vm239 = vmand %vm237, %vm238
    %240 = vst.msk [vmem:[#allocation2] ss:$2 sm:$0x3] %vm239, %v234
    %v241 = vcombine.high %v227, %v227
    %v243 = vunpack.c.l.s4 1966171168
    %v244 = vunpack.c.0.s8 %v243
    %v245 = vlaneseq
    %v246 = vshrl.u32 %v245, 7
    %v247 = vsub.s32 %v244, %v246
    %v248 = vrot.slane %v241, %v247
    %s250 = scalar_lea.vmem [#allocation2], 4
    %251 = vst.msk [vmem:[%s250] ss:$2 sm:$0x3] %vm239, %v248
    %v252 = vcombine.high %v234, %v234
    %s254 = scalar_lea.vmem [#allocation2], 8
    %255 = vst.msk [vmem:[%s254] ss:$2 sm:$0x3] %vm239, %v252
    %v256 = vcombine.high %v248, %v248
    %s258 = scalar_lea.vmem [#allocation2], 12
    %259 = vst.msk [vmem:[%s258] ss:$2 sm:$0x3] %vm239, %v256
    %v260 = vcombine.high %v214, %v215
    %v262 = vunpack.c.l.s4 1966171168
    %v263 = vunpack.c.0.s8 %v262
    %v264 = vlaneseq
    %v265 = vshrl.u32 %v264, 7
    %v266 = vsub.s32 %v263, %v265
    %v267 = vrot.slane %v260, %v266
    %v269 = vunpack.c.l.s4 1966171168
    %v270 = vunpack.c.0.s8 %v269
    %v271 = vlaneseq
    %v272 = vshrl.u32 %v271, 7
    %v273 = vsub.s32 %v270, %v272
    %v274 = vrot.slane %v267, %v273
    %s276 = scalar_lea.vmem [#allocation2], 16
    %277 = vst.msk [vmem:[%s276] ss:$2 sm:$0x3] %vm239, %v274
    %v278 = vcombine.high %v267, %v267
    %v280 = vunpack.c.l.s4 1966171168
    %v281 = vunpack.c.0.s8 %v280
    %v282 = vlaneseq
    %v283 = vshrl.u32 %v282, 7
    %v284 = vsub.s32 %v281, %v283
    %v285 = vrot.slane %v278, %v284
    %s287 = scalar_lea.vmem [#allocation2], 20
    %288 = vst.msk [vmem:[%s287] ss:$2 sm:$0x3] %vm239, %v285
    %v289 = vcombine.high %v274, %v274
    %s291 = scalar_lea.vmem [#allocation2], 24
    %292 = vst.msk [vmem:[%s291] ss:$2 sm:$0x3] %vm239, %v289
    %v293 = vcombine.high %v285, %v285
    %s295 = scalar_lea.vmem [#allocation2], 28
    %296 = vst.msk [vmem:[%s295] ss:$2 sm:$0x3] %vm239, %v293
    %v299 = vcombine.low %v216, %v217
    %v301 = vunpack.c.l.s4 1966171168
    %v302 = vunpack.c.0.s8 %v301
    %v303 = vlaneseq
    %v304 = vshrl.u32 %v303, 7
    %v305 = vsub.s32 %v302, %v304
    %v306 = vrot.slane %v299, %v305
    %v308 = vunpack.c.l.s4 1966171168
    %v309 = vunpack.c.0.s8 %v308
    %v310 = vlaneseq
    %v311 = vshrl.u32 %v310, 7
    %v312 = vsub.s32 %v309, %v311
    %v313 = vrot.slane %v306, %v312
    %s315 = scalar_lea.vmem [#allocation2], 1
    %316 = vst.msk [vmem:[%s315] ss:$2 sm:$0x3] %vm239, %v313
    %v317 = vcombine.high %v306, %v306
    %v319 = vunpack.c.l.s4 1966171168
    %v320 = vunpack.c.0.s8 %v319
    %v321 = vlaneseq
    %v322 = vshrl.u32 %v321, 7
    %v323 = vsub.s32 %v320, %v322
    %v324 = vrot.slane %v317, %v323
    %s326 = scalar_lea.vmem [#allocation2], 5
    %327 = vst.msk [vmem:[%s326] ss:$2 sm:$0x3] %vm239, %v324
    %v328 = vcombine.high %v313, %v313
    %s330 = scalar_lea.vmem [#allocation2], 9
    %331 = vst.msk [vmem:[%s330] ss:$2 sm:$0x3] %vm239, %v328
    %v332 = vcombine.high %v324, %v324
    %s334 = scalar_lea.vmem [#allocation2], 13
    %335 = vst.msk [vmem:[%s334] ss:$2 sm:$0x3] %vm239, %v332
    %v336 = vcombine.high %v216, %v217
    %v338 = vunpack.c.l.s4 1966171168
    %v339 = vunpack.c.0.s8 %v338
    %v340 = vlaneseq
    %v341 = vshrl.u32 %v340, 7
    %v342 = vsub.s32 %v339, %v341
    %v343 = vrot.slane %v336, %v342
    %v345 = vunpack.c.l.s4 1966171168
    %v346 = vunpack.c.0.s8 %v345
    %v347 = vlaneseq
    %v348 = vshrl.u32 %v347, 7
    %v349 = vsub.s32 %v346, %v348
    %v350 = vrot.slane %v343, %v349
    %s352 = scalar_lea.vmem [#allocation2], 17
    %353 = vst.msk [vmem:[%s352] ss:$2 sm:$0x3] %vm239, %v350
    %v354 = vcombine.high %v343, %v343
    %v356 = vunpack.c.l.s4 1966171168
    %v357 = vunpack.c.0.s8 %v356
    %v358 = vlaneseq
    %v359 = vshrl.u32 %v358, 7
    %v360 = vsub.s32 %v357, %v359
    %v361 = vrot.slane %v354, %v360
    %s363 = scalar_lea.vmem [#allocation2], 21
    %364 = vst.msk [vmem:[%s363] ss:$2 sm:$0x3] %vm239, %v361
    %v365 = vcombine.high %v350, %v350
    %s367 = scalar_lea.vmem [#allocation2], 25
    %368 = vst.msk [vmem:[%s367] ss:$2 sm:$0x3] %vm239, %v365
    %v369 = vcombine.high %v361, %v361
    %s371 = scalar_lea.vmem [#allocation2], 29
    %372 = vst.msk [vmem:[%s371] ss:$2 sm:$0x3] %vm239, %v369
    %v373 = vld [vmem:[#allocation2] sm:$0xff]
    %v374 = vld [vmem:[#allocation2 + $0x8] sm:$0xff]
    %v375 = vld [vmem:[#allocation2 + $0x10] sm:$0xff]
    %v376 = vld [vmem:[#allocation2 + $0x18] sm:$0xff]
    %v381 = vcombine.high %v373, %v373
    %v383 = vunpack.c.l.s4 1983009808
    %v384 = vunpack.c.0.s8 %v383
    %v385 = vlaneseq
    %v386 = vshrl.u32 %v385, 7
    %v387 = vsub.s32 %v384, %v386
    %v388 = vrot.slane %v373, %v387
    %v390 = vunpack.c.l.s4 1983009808
    %v391 = vunpack.c.0.s8 %v390
    %v392 = vlaneseq
    %v393 = vshrl.u32 %v392, 7
    %v394 = vsub.s32 %v391, %v393
    %v395 = vrot.slane %v381, %v394
    %v396 = vcombine.high %v388, %v388
    %v397 = vcombine.high %v395, %v395
    %v398 = vcombine.high %v374, %v374
    %v400 = vunpack.c.l.s4 1983009808
    %v401 = vunpack.c.0.s8 %v400
    %v402 = vlaneseq
    %v403 = vshrl.u32 %v402, 7
    %v404 = vsub.s32 %v401, %v403
    %v405 = vrot.slane %v374, %v404
    %v407 = vunpack.c.l.s4 1983009808
    %v408 = vunpack.c.0.s8 %v407
    %v409 = vlaneseq
    %v410 = vshrl.u32 %v409, 7
    %v411 = vsub.s32 %v408, %v410
    %v412 = vrot.slane %v398, %v411
    %v413 = vcombine.high %v405, %v405
    %v414 = vcombine.high %v412, %v412
    %v415 = vcombine.high %v375, %v375
    %v417 = vunpack.c.l.s4 1983009808
    %v418 = vunpack.c.0.s8 %v417
    %v419 = vlaneseq
    %v420 = vshrl.u32 %v419, 7
    %v421 = vsub.s32 %v418, %v420
    %v422 = vrot.slane %v375, %v421
    %v424 = vunpack.c.l.s4 1983009808
    %v425 = vunpack.c.0.s8 %v424
    %v426 = vlaneseq
    %v427 = vshrl.u32 %v426, 7
    %v428 = vsub.s32 %v425, %v427
    %v429 = vrot.slane %v415, %v428
    %v430 = vcombine.high %v422, %v422
    %v431 = vcombine.high %v429, %v429
    %v432 = vcombine.high %v376, %v376
    %v434 = vunpack.c.l.s4 1983009808
    %v435 = vunpack.c.0.s8 %v434
    %v436 = vlaneseq
    %v437 = vshrl.u32 %v436, 7
    %v438 = vsub.s32 %v435, %v437
    %v439 = vrot.slane %v376, %v438
    %v441 = vunpack.c.l.s4 1983009808
    %v442 = vunpack.c.0.s8 %v441
    %v443 = vlaneseq
    %v444 = vshrl.u32 %v443, 7
    %v445 = vsub.s32 %v442, %v444
    %v446 = vrot.slane %v432, %v445
    %v447 = vcombine.high %v439, %v439
    %v448 = vcombine.high %v446, %v446
    %v465 = vpack.c.bf16 %v388, %v388
    %v466 = vpack.c.bf16 %v396, %v396
    %v467 = vpack.c.bf16 %v395, %v395
    %v468 = vpack.c.bf16 %v397, %v397
    %v469 = vpack.c.bf16 %v405, %v405
    %v470 = vpack.c.bf16 %v413, %v413
    %v471 = vpack.c.bf16 %v412, %v412
    %v472 = vpack.c.bf16 %v414, %v414
    %v473 = vpack.c.bf16 %v422, %v422
    %v474 = vpack.c.bf16 %v430, %v430
    %v475 = vpack.c.bf16 %v429, %v429
    %v476 = vpack.c.bf16 %v431, %v431
    %v477 = vpack.c.bf16 %v439, %v439
    %v478 = vpack.c.bf16 %v447, %v447
    %v479 = vpack.c.bf16 %v446, %v446
    %v480 = vpack.c.bf16 %v448, %v448
    %v481 = vld [vmem:[%s3] sm:$0xf]
    %v482 = vld [vmem:[%s3 + $0x4] sm:$0xf]
    %v483 = vld [vmem:[%s3 + $0x8] sm:$0xf]
    %v484 = vld [vmem:[%s3 + $0xc] sm:$0xf]
    %v485 = vld [vmem:[%s3 + $0x10] sm:$0xf]
    %v486 = vld [vmem:[%s3 + $0x14] sm:$0xf]
    %v487 = vld [vmem:[%s3 + $0x18] sm:$0xf]
    %v488 = vld [vmem:[%s3 + $0x1c] sm:$0xf]
    %v489 = vld [vmem:[%s3 + $0x20] sm:$0xf]
    %v490 = vld [vmem:[%s3 + $0x24] sm:$0xf]
    %v491 = vld [vmem:[%s3 + $0x28] sm:$0xf]
    %v492 = vld [vmem:[%s3 + $0x2c] sm:$0xf]
    %v493 = vld [vmem:[%s3 + $0x30] sm:$0xf]
    %v494 = vld [vmem:[%s3 + $0x34] sm:$0xf]
    %v495 = vld [vmem:[%s3 + $0x38] sm:$0xf]
    %v496 = vld [vmem:[%s3 + $0x3c] sm:$0xf]
    %v497 = vld [vmem:[%s3 + $0x40] sm:$0xf]
    %v498 = vld [vmem:[%s3 + $0x44] sm:$0xf]
    %v499 = vld [vmem:[%s3 + $0x48] sm:$0xf]
    %v500 = vld [vmem:[%s3 + $0x4c] sm:$0xf]
    %v501 = vld [vmem:[%s3 + $0x50] sm:$0xf]
    %v502 = vld [vmem:[%s3 + $0x54] sm:$0xf]
    %v503 = vld [vmem:[%s3 + $0x58] sm:$0xf]
    %v504 = vld [vmem:[%s3 + $0x5c] sm:$0xf]
    %v505 = vld [vmem:[%s3 + $0x60] sm:$0xf]
    %v506 = vld [vmem:[%s3 + $0x64] sm:$0xf]
    %v507 = vld [vmem:[%s3 + $0x68] sm:$0xf]
    %v508 = vld [vmem:[%s3 + $0x6c] sm:$0xf]
    %v509 = vld [vmem:[%s3 + $0x70] sm:$0xf]
    %v510 = vld [vmem:[%s3 + $0x74] sm:$0xf]
    %v511 = vld [vmem:[%s3 + $0x78] sm:$0xf]
    %v512 = vld [vmem:[%s3 + $0x7c] sm:$0xf]
    %v513 = vld [vmem:[%s3 + $0x80] sm:$0xf]
    %v514 = vld [vmem:[%s3 + $0x84] sm:$0xf]
    %v515 = vld [vmem:[%s3 + $0x88] sm:$0xf]
    %v516 = vld [vmem:[%s3 + $0x8c] sm:$0xf]
    %v517 = vld [vmem:[%s3 + $0x90] sm:$0xf]
    %v518 = vld [vmem:[%s3 + $0x94] sm:$0xf]
    %v519 = vld [vmem:[%s3 + $0x98] sm:$0xf]
    %v520 = vld [vmem:[%s3 + $0x9c] sm:$0xf]
    %v521 = vld [vmem:[%s3 + $0xa0] sm:$0xf]
    %v522 = vld [vmem:[%s3 + $0xa4] sm:$0xf]
    %v523 = vld [vmem:[%s3 + $0xa8] sm:$0xf]
    %v524 = vld [vmem:[%s3 + $0xac] sm:$0xf]
    %v525 = vld [vmem:[%s3 + $0xb0] sm:$0xf]
    %v526 = vld [vmem:[%s3 + $0xb4] sm:$0xf]
    %v527 = vld [vmem:[%s3 + $0xb8] sm:$0xf]
    %v528 = vld [vmem:[%s3 + $0xbc] sm:$0xf]
    %v529 = vld [vmem:[%s3 + $0xc0] sm:$0xf]
    %v530 = vld [vmem:[%s3 + $0xc4] sm:$0xf]
    %v531 = vld [vmem:[%s3 + $0xc8] sm:$0xf]
    %v532 = vld [vmem:[%s3 + $0xcc] sm:$0xf]
    %v533 = vld [vmem:[%s3 + $0xd0] sm:$0xf]
    %v534 = vld [vmem:[%s3 + $0xd4] sm:$0xf]
    %v535 = vld [vmem:[%s3 + $0xd8] sm:$0xf]
    %v536 = vld [vmem:[%s3 + $0xdc] sm:$0xf]
    %v537 = vld [vmem:[%s3 + $0xe0] sm:$0xf]
    %v538 = vld [vmem:[%s3 + $0xe4] sm:$0xf]
    %v539 = vld [vmem:[%s3 + $0xe8] sm:$0xf]
    %v540 = vld [vmem:[%s3 + $0xec] sm:$0xf]
    %v541 = vld [vmem:[%s3 + $0xf0] sm:$0xf]
    %v542 = vld [vmem:[%s3 + $0xf4] sm:$0xf]
    %v543 = vld [vmem:[%s3 + $0xf8] sm:$0xf]
    %v544 = vld [vmem:[%s3 + $0xfc] sm:$0xf]
    %v545 = vld [vmem:[%s3 + $0x100] sm:$0xf]
    %v546 = vld [vmem:[%s3 + $0x104] sm:$0xf]
    %v547 = vld [vmem:[%s3 + $0x108] sm:$0xf]
    %v548 = vld [vmem:[%s3 + $0x10c] sm:$0xf]
    %v549 = vld [vmem:[%s3 + $0x110] sm:$0xf]
    %v550 = vld [vmem:[%s3 + $0x114] sm:$0xf]
    %v551 = vld [vmem:[%s3 + $0x118] sm:$0xf]
    %v552 = vld [vmem:[%s3 + $0x11c] sm:$0xf]
    %v553 = vld [vmem:[%s3 + $0x120] sm:$0xf]
    %v554 = vld [vmem:[%s3 + $0x124] sm:$0xf]
    %v555 = vld [vmem:[%s3 + $0x128] sm:$0xf]
    %v556 = vld [vmem:[%s3 + $0x12c] sm:$0xf]
    %v557 = vld [vmem:[%s3 + $0x130] sm:$0xf]
    %v558 = vld [vmem:[%s3 + $0x134] sm:$0xf]
    %v559 = vld [vmem:[%s3 + $0x138] sm:$0xf]
    %v560 = vld [vmem:[%s3 + $0x13c] sm:$0xf]
    %v561 = vld [vmem:[%s3 + $0x140] sm:$0xf]
    %v562 = vld [vmem:[%s3 + $0x144] sm:$0xf]
    %v563 = vld [vmem:[%s3 + $0x148] sm:$0xf]
    %v564 = vld [vmem:[%s3 + $0x14c] sm:$0xf]
    %v565 = vld [vmem:[%s3 + $0x150] sm:$0xf]
    %v566 = vld [vmem:[%s3 + $0x154] sm:$0xf]
    %v567 = vld [vmem:[%s3 + $0x158] sm:$0xf]
    %v568 = vld [vmem:[%s3 + $0x15c] sm:$0xf]
    %v569 = vld [vmem:[%s3 + $0x160] sm:$0xf]
    %v570 = vld [vmem:[%s3 + $0x164] sm:$0xf]
    %v571 = vld [vmem:[%s3 + $0x168] sm:$0xf]
    %v572 = vld [vmem:[%s3 + $0x16c] sm:$0xf]
    %v573 = vld [vmem:[%s3 + $0x170] sm:$0xf]
    %v574 = vld [vmem:[%s3 + $0x174] sm:$0xf]
    %v575 = vld [vmem:[%s3 + $0x178] sm:$0xf]
    %v576 = vld [vmem:[%s3 + $0x17c] sm:$0xf]
    %v577 = vld [vmem:[%s3 + $0x180] sm:$0xf]
    %v578 = vld [vmem:[%s3 + $0x184] sm:$0xf]
    %v579 = vld [vmem:[%s3 + $0x188] sm:$0xf]
    %v580 = vld [vmem:[%s3 + $0x18c] sm:$0xf]
    %v581 = vld [vmem:[%s3 + $0x190] sm:$0xf]
    %v582 = vld [vmem:[%s3 + $0x194] sm:$0xf]
    %v583 = vld [vmem:[%s3 + $0x198] sm:$0xf]
    %v584 = vld [vmem:[%s3 + $0x19c] sm:$0xf]
    %v585 = vld [vmem:[%s3 + $0x1a0] sm:$0xf]
    %v586 = vld [vmem:[%s3 + $0x1a4] sm:$0xf]
    %v587 = vld [vmem:[%s3 + $0x1a8] sm:$0xf]
    %v588 = vld [vmem:[%s3 + $0x1ac] sm:$0xf]
    %v589 = vld [vmem:[%s3 + $0x1b0] sm:$0xf]
    %v590 = vld [vmem:[%s3 + $0x1b4] sm:$0xf]
    %v591 = vld [vmem:[%s3 + $0x1b8] sm:$0xf]
    %v592 = vld [vmem:[%s3 + $0x1bc] sm:$0xf]
    %v593 = vld [vmem:[%s3 + $0x1c0] sm:$0xf]
    %v594 = vld [vmem:[%s3 + $0x1c4] sm:$0xf]
    %v595 = vld [vmem:[%s3 + $0x1c8] sm:$0xf]
    %v596 = vld [vmem:[%s3 + $0x1cc] sm:$0xf]
    %v597 = vld [vmem:[%s3 + $0x1d0] sm:$0xf]
    %v598 = vld [vmem:[%s3 + $0x1d4] sm:$0xf]
    %v599 = vld [vmem:[%s3 + $0x1d8] sm:$0xf]
    %v600 = vld [vmem:[%s3 + $0x1dc] sm:$0xf]
    %v601 = vld [vmem:[%s3 + $0x1e0] sm:$0xf]
    %v602 = vld [vmem:[%s3 + $0x1e4] sm:$0xf]
    %v603 = vld [vmem:[%s3 + $0x1e8] sm:$0xf]
    %v604 = vld [vmem:[%s3 + $0x1ec] sm:$0xf]
    %v605 = vld [vmem:[%s3 + $0x1f0] sm:$0xf]
    %v606 = vld [vmem:[%s3 + $0x1f4] sm:$0xf]
    %v607 = vld [vmem:[%s3 + $0x1f8] sm:$0xf]
    %v608 = vld [vmem:[%s3 + $0x1fc] sm:$0xf]
    %v609 = vld [vmem:[%s3 + $0x200] sm:$0xf]
    %v610 = vld [vmem:[%s3 + $0x204] sm:$0xf]
    %v611 = vld [vmem:[%s3 + $0x208] sm:$0xf]
    %v612 = vld [vmem:[%s3 + $0x20c] sm:$0xf]
    %v613 = vld [vmem:[%s3 + $0x210] sm:$0xf]
    %v614 = vld [vmem:[%s3 + $0x214] sm:$0xf]
    %v615 = vld [vmem:[%s3 + $0x218] sm:$0xf]
    %v616 = vld [vmem:[%s3 + $0x21c] sm:$0xf]
    %v617 = vld [vmem:[%s3 + $0x220] sm:$0xf]
    %v618 = vld [vmem:[%s3 + $0x224] sm:$0xf]
    %v619 = vld [vmem:[%s3 + $0x228] sm:$0xf]
    %v620 = vld [vmem:[%s3 + $0x22c] sm:$0xf]
    %v621 = vld [vmem:[%s3 + $0x230] sm:$0xf]
    %v622 = vld [vmem:[%s3 + $0x234] sm:$0xf]
    %v623 = vld [vmem:[%s3 + $0x238] sm:$0xf]
    %v624 = vld [vmem:[%s3 + $0x23c] sm:$0xf]
    %v625 = vld [vmem:[%s3 + $0x240] sm:$0xf]
    %v626 = vld [vmem:[%s3 + $0x244] sm:$0xf]
    %v627 = vld [vmem:[%s3 + $0x248] sm:$0xf]
    %v628 = vld [vmem:[%s3 + $0x24c] sm:$0xf]
    %v629 = vld [vmem:[%s3 + $0x250] sm:$0xf]
    %v630 = vld [vmem:[%s3 + $0x254] sm:$0xf]
    %v631 = vld [vmem:[%s3 + $0x258] sm:$0xf]
    %v632 = vld [vmem:[%s3 + $0x25c] sm:$0xf]
    %v633 = vld [vmem:[%s3 + $0x260] sm:$0xf]
    %v634 = vld [vmem:[%s3 + $0x264] sm:$0xf]
    %v635 = vld [vmem:[%s3 + $0x268] sm:$0xf]
    %v636 = vld [vmem:[%s3 + $0x26c] sm:$0xf]
    %v637 = vld [vmem:[%s3 + $0x270] sm:$0xf]
    %v638 = vld [vmem:[%s3 + $0x274] sm:$0xf]
    %v639 = vld [vmem:[%s3 + $0x278] sm:$0xf]
    %v640 = vld [vmem:[%s3 + $0x27c] sm:$0xf]
    %v641 = vld [vmem:[%s3 + $0x280] sm:$0xf]
    %v642 = vld [vmem:[%s3 + $0x284] sm:$0xf]
    %v643 = vld [vmem:[%s3 + $0x288] sm:$0xf]
    %v644 = vld [vmem:[%s3 + $0x28c] sm:$0xf]
    %v645 = vld [vmem:[%s3 + $0x290] sm:$0xf]
    %v646 = vld [vmem:[%s3 + $0x294] sm:$0xf]
    %v647 = vld [vmem:[%s3 + $0x298] sm:$0xf]
    %v648 = vld [vmem:[%s3 + $0x29c] sm:$0xf]
    %v649 = vld [vmem:[%s3 + $0x2a0] sm:$0xf]
    %v650 = vld [vmem:[%s3 + $0x2a4] sm:$0xf]
    %v651 = vld [vmem:[%s3 + $0x2a8] sm:$0xf]
    %v652 = vld [vmem:[%s3 + $0x2ac] sm:$0xf]
    %v653 = vld [vmem:[%s3 + $0x2b0] sm:$0xf]
    %v654 = vld [vmem:[%s3 + $0x2b4] sm:$0xf]
    %v655 = vld [vmem:[%s3 + $0x2b8] sm:$0xf]
    %v656 = vld [vmem:[%s3 + $0x2bc] sm:$0xf]
    %v657 = vld [vmem:[%s3 + $0x2c0] sm:$0xf]
    %v658 = vld [vmem:[%s3 + $0x2c4] sm:$0xf]
    %v659 = vld [vmem:[%s3 + $0x2c8] sm:$0xf]
    %v660 = vld [vmem:[%s3 + $0x2cc] sm:$0xf]
    %v661 = vld [vmem:[%s3 + $0x2d0] sm:$0xf]
    %v662 = vld [vmem:[%s3 + $0x2d4] sm:$0xf]
    %v663 = vld [vmem:[%s3 + $0x2d8] sm:$0xf]
    %v664 = vld [vmem:[%s3 + $0x2dc] sm:$0xf]
    %v665 = vld [vmem:[%s3 + $0x2e0] sm:$0xf]
    %v666 = vld [vmem:[%s3 + $0x2e4] sm:$0xf]
    %v667 = vld [vmem:[%s3 + $0x2e8] sm:$0xf]
    %v668 = vld [vmem:[%s3 + $0x2ec] sm:$0xf]
    %v669 = vld [vmem:[%s3 + $0x2f0] sm:$0xf]
    %v670 = vld [vmem:[%s3 + $0x2f4] sm:$0xf]
    %v671 = vld [vmem:[%s3 + $0x2f8] sm:$0xf]
    %v672 = vld [vmem:[%s3 + $0x2fc] sm:$0xf]
    %v673 = vld [vmem:[%s3 + $0x300] sm:$0xf]
    %v674 = vld [vmem:[%s3 + $0x304] sm:$0xf]
    %v675 = vld [vmem:[%s3 + $0x308] sm:$0xf]
    %v676 = vld [vmem:[%s3 + $0x30c] sm:$0xf]
    %v677 = vld [vmem:[%s3 + $0x310] sm:$0xf]
    %v678 = vld [vmem:[%s3 + $0x314] sm:$0xf]
    %v679 = vld [vmem:[%s3 + $0x318] sm:$0xf]
    %v680 = vld [vmem:[%s3 + $0x31c] sm:$0xf]
    %v681 = vld [vmem:[%s3 + $0x320] sm:$0xf]
    %v682 = vld [vmem:[%s3 + $0x324] sm:$0xf]
    %v683 = vld [vmem:[%s3 + $0x328] sm:$0xf]
    %v684 = vld [vmem:[%s3 + $0x32c] sm:$0xf]
    %v685 = vld [vmem:[%s3 + $0x330] sm:$0xf]
    %v686 = vld [vmem:[%s3 + $0x334] sm:$0xf]
    %v687 = vld [vmem:[%s3 + $0x338] sm:$0xf]
    %v688 = vld [vmem:[%s3 + $0x33c] sm:$0xf]
    %v689 = vld [vmem:[%s3 + $0x340] sm:$0xf]
    %v690 = vld [vmem:[%s3 + $0x344] sm:$0xf]
    %v691 = vld [vmem:[%s3 + $0x348] sm:$0xf]
    %v692 = vld [vmem:[%s3 + $0x34c] sm:$0xf]
    %v693 = vld [vmem:[%s3 + $0x350] sm:$0xf]
    %v694 = vld [vmem:[%s3 + $0x354] sm:$0xf]
    %v695 = vld [vmem:[%s3 + $0x358] sm:$0xf]
    %v696 = vld [vmem:[%s3 + $0x35c] sm:$0xf]
    %v697 = vld [vmem:[%s3 + $0x360] sm:$0xf]
    %v698 = vld [vmem:[%s3 + $0x364] sm:$0xf]
    %v699 = vld [vmem:[%s3 + $0x368] sm:$0xf]
    %v700 = vld [vmem:[%s3 + $0x36c] sm:$0xf]
    %v701 = vld [vmem:[%s3 + $0x370] sm:$0xf]
    %v702 = vld [vmem:[%s3 + $0x374] sm:$0xf]
    %v703 = vld [vmem:[%s3 + $0x378] sm:$0xf]
    %v704 = vld [vmem:[%s3 + $0x37c] sm:$0xf]
    %v705 = vld [vmem:[%s3 + $0x380] sm:$0xf]
    %v706 = vld [vmem:[%s3 + $0x384] sm:$0xf]
    %v707 = vld [vmem:[%s3 + $0x388] sm:$0xf]
    %v708 = vld [vmem:[%s3 + $0x38c] sm:$0xf]
    %v709 = vld [vmem:[%s3 + $0x390] sm:$0xf]
    %v710 = vld [vmem:[%s3 + $0x394] sm:$0xf]
    %v711 = vld [vmem:[%s3 + $0x398] sm:$0xf]
    %v712 = vld [vmem:[%s3 + $0x39c] sm:$0xf]
    %v713 = vld [vmem:[%s3 + $0x3a0] sm:$0xf]
    %v714 = vld [vmem:[%s3 + $0x3a4] sm:$0xf]
    %v715 = vld [vmem:[%s3 + $0x3a8] sm:$0xf]
    %v716 = vld [vmem:[%s3 + $0x3ac] sm:$0xf]
    %v717 = vld [vmem:[%s3 + $0x3b0] sm:$0xf]
    %v718 = vld [vmem:[%s3 + $0x3b4] sm:$0xf]
    %v719 = vld [vmem:[%s3 + $0x3b8] sm:$0xf]
    %v720 = vld [vmem:[%s3 + $0x3bc] sm:$0xf]
    %v721 = vld [vmem:[%s3 + $0x3c0] sm:$0xf]
    %v722 = vld [vmem:[%s3 + $0x3c4] sm:$0xf]
    %v723 = vld [vmem:[%s3 + $0x3c8] sm:$0xf]
    %v724 = vld [vmem:[%s3 + $0x3cc] sm:$0xf]
    %v725 = vld [vmem:[%s3 + $0x3d0] sm:$0xf]
    %v726 = vld [vmem:[%s3 + $0x3d4] sm:$0xf]
    %v727 = vld [vmem:[%s3 + $0x3d8] sm:$0xf]
    %v728 = vld [vmem:[%s3 + $0x3dc] sm:$0xf]
    %v729 = vld [vmem:[%s3 + $0x3e0] sm:$0xf]
    %v730 = vld [vmem:[%s3 + $0x3e4] sm:$0xf]
    %v731 = vld [vmem:[%s3 + $0x3e8] sm:$0xf]
    %v732 = vld [vmem:[%s3 + $0x3ec] sm:$0xf]
    %v733 = vld [vmem:[%s3 + $0x3f0] sm:$0xf]
    %v734 = vld [vmem:[%s3 + $0x3f4] sm:$0xf]
    %v735 = vld [vmem:[%s3 + $0x3f8] sm:$0xf]
    %v736 = vld [vmem:[%s3 + $0x3fc] sm:$0xf]
    %v737 = vld [vmem:[%s4] sm:$0x1]
    %v739 = vlaneseq
    %v740 = vshrl.u32 %v739, 7
    %v741 = vsub.s32 0, %v740
    %v742 = vrot.slane %v737, %v741
    %v1000 = vunpack.c.l.b16 %v481
    %v1001 = vunpack.c.l.b16 %v482
    %v1002 = vunpack.c.l.b16 %v483
    %v1003 = vunpack.c.l.b16 %v484
    %v1004 = vunpack.c.l.b16 %v485
    %v1005 = vunpack.c.l.b16 %v486
    %v1006 = vunpack.c.l.b16 %v487
    %v1007 = vunpack.c.l.b16 %v488
    %v1008 = vunpack.c.l.b16 %v489
    %v1009 = vunpack.c.l.b16 %v490
    %v1010 = vunpack.c.l.b16 %v491
    %v1011 = vunpack.c.l.b16 %v492
    %v1012 = vunpack.c.l.b16 %v493
    %v1013 = vunpack.c.l.b16 %v494
    %v1014 = vunpack.c.l.b16 %v495
    %v1015 = vunpack.c.l.b16 %v496
    %v1016 = vunpack.c.l.b16 %v497
    %v1017 = vunpack.c.l.b16 %v498
    %v1018 = vunpack.c.l.b16 %v499
    %v1019 = vunpack.c.l.b16 %v500
    %v1020 = vunpack.c.l.b16 %v501
    %v1021 = vunpack.c.l.b16 %v502
    %v1022 = vunpack.c.l.b16 %v503
    %v1023 = vunpack.c.l.b16 %v504
    %v1024 = vunpack.c.l.b16 %v505
    %v1025 = vunpack.c.l.b16 %v506
    %v1026 = vunpack.c.l.b16 %v507
    %v1027 = vunpack.c.l.b16 %v508
    %v1028 = vunpack.c.l.b16 %v509
    %v1029 = vunpack.c.l.b16 %v510
    %v1030 = vunpack.c.l.b16 %v511
    %v1031 = vunpack.c.l.b16 %v512
    %v1032 = vunpack.c.l.b16 %v513
    %v1033 = vunpack.c.l.b16 %v514
    %v1034 = vunpack.c.l.b16 %v515
    %v1035 = vunpack.c.l.b16 %v516
    %v1036 = vunpack.c.l.b16 %v517
    %v1037 = vunpack.c.l.b16 %v518
    %v1038 = vunpack.c.l.b16 %v519
    %v1039 = vunpack.c.l.b16 %v520
    %v1040 = vunpack.c.l.b16 %v521
    %v1041 = vunpack.c.l.b16 %v522
    %v1042 = vunpack.c.l.b16 %v523
    %v1043 = vunpack.c.l.b16 %v524
    %v1044 = vunpack.c.l.b16 %v525
    %v1045 = vunpack.c.l.b16 %v526
    %v1046 = vunpack.c.l.b16 %v527
    %v1047 = vunpack.c.l.b16 %v528
    %v1048 = vunpack.c.l.b16 %v529
    %v1049 = vunpack.c.l.b16 %v530
    %v1050 = vunpack.c.l.b16 %v531
    %v1051 = vunpack.c.l.b16 %v532
    %v1052 = vunpack.c.l.b16 %v533
    %v1053 = vunpack.c.l.b16 %v534
    %v1054 = vunpack.c.l.b16 %v535
    %v1055 = vunpack.c.l.b16 %v536
    %v1056 = vunpack.c.l.b16 %v537
    %v1057 = vunpack.c.l.b16 %v538
    %v1058 = vunpack.c.l.b16 %v539
    %v1059 = vunpack.c.l.b16 %v540
    %v1060 = vunpack.c.l.b16 %v541
    %v1061 = vunpack.c.l.b16 %v542
    %v1062 = vunpack.c.l.b16 %v543
    %v1063 = vunpack.c.l.b16 %v544
    %v1064 = vunpack.c.l.b16 %v545
    %v1065 = vunpack.c.l.b16 %v546
    %v1066 = vunpack.c.l.b16 %v547
    %v1067 = vunpack.c.l.b16 %v548
    %v1068 = vunpack.c.l.b16 %v549
    %v1069 = vunpack.c.l.b16 %v550
    %v1070 = vunpack.c.l.b16 %v551
    %v1071 = vunpack.c.l.b16 %v552
    %v1072 = vunpack.c.l.b16 %v553
    %v1073 = vunpack.c.l.b16 %v554
    %v1074 = vunpack.c.l.b16 %v555
    %v1075 = vunpack.c.l.b16 %v556
    %v1076 = vunpack.c.l.b16 %v557
    %v1077 = vunpack.c.l.b16 %v558
    %v1078 = vunpack.c.l.b16 %v559
    %v1079 = vunpack.c.l.b16 %v560
    %v1080 = vunpack.c.l.b16 %v561
    %v1081 = vunpack.c.l.b16 %v562
    %v1082 = vunpack.c.l.b16 %v563
    %v1083 = vunpack.c.l.b16 %v564
    %v1084 = vunpack.c.l.b16 %v565
    %v1085 = vunpack.c.l.b16 %v566
    %v1086 = vunpack.c.l.b16 %v567
    %v1087 = vunpack.c.l.b16 %v568
    %v1088 = vunpack.c.l.b16 %v569
    %v1089 = vunpack.c.l.b16 %v570
    %v1090 = vunpack.c.l.b16 %v571
    %v1091 = vunpack.c.l.b16 %v572
    %v1092 = vunpack.c.l.b16 %v573
    %v1093 = vunpack.c.l.b16 %v574
    %v1094 = vunpack.c.l.b16 %v575
    %v1095 = vunpack.c.l.b16 %v576
    %v1096 = vunpack.c.l.b16 %v577
    %v1097 = vunpack.c.l.b16 %v578
    %v1098 = vunpack.c.l.b16 %v579
    %v1099 = vunpack.c.l.b16 %v580
    %v1100 = vunpack.c.l.b16 %v581
    %v1101 = vunpack.c.l.b16 %v582
    %v1102 = vunpack.c.l.b16 %v583
    %v1103 = vunpack.c.l.b16 %v584
    %v1104 = vunpack.c.l.b16 %v585
    %v1105 = vunpack.c.l.b16 %v586
    %v1106 = vunpack.c.l.b16 %v587
    %v1107 = vunpack.c.l.b16 %v588
    %v1108 = vunpack.c.l.b16 %v589
    %v1109 = vunpack.c.l.b16 %v590
    %v1110 = vunpack.c.l.b16 %v591
    %v1111 = vunpack.c.l.b16 %v592
    %v1112 = vunpack.c.l.b16 %v593
    %v1113 = vunpack.c.l.b16 %v594
    %v1114 = vunpack.c.l.b16 %v595
    %v1115 = vunpack.c.l.b16 %v596
    %v1116 = vunpack.c.l.b16 %v597
    %v1117 = vunpack.c.l.b16 %v598
    %v1118 = vunpack.c.l.b16 %v599
    %v1119 = vunpack.c.l.b16 %v600
    %v1120 = vunpack.c.l.b16 %v601
    %v1121 = vunpack.c.l.b16 %v602
    %v1122 = vunpack.c.l.b16 %v603
    %v1123 = vunpack.c.l.b16 %v604
    %v1124 = vunpack.c.l.b16 %v605
    %v1125 = vunpack.c.l.b16 %v606
    %v1126 = vunpack.c.l.b16 %v607
    %v1127 = vunpack.c.l.b16 %v608
    %v1128 = vunpack.c.l.b16 %v609
    %v1129 = vunpack.c.l.b16 %v610
    %v1130 = vunpack.c.l.b16 %v611
    %v1131 = vunpack.c.l.b16 %v612
    %v1132 = vunpack.c.l.b16 %v613
    %v1133 = vunpack.c.l.b16 %v614
    %v1134 = vunpack.c.l.b16 %v615
    %v1135 = vunpack.c.l.b16 %v616
    %v1136 = vunpack.c.l.b16 %v617
    %v1137 = vunpack.c.l.b16 %v618
    %v1138 = vunpack.c.l.b16 %v619
    %v1139 = vunpack.c.l.b16 %v620
    %v1140 = vunpack.c.l.b16 %v621
    %v1141 = vunpack.c.l.b16 %v622
    %v1142 = vunpack.c.l.b16 %v623
    %v1143 = vunpack.c.l.b16 %v624
    %v1144 = vunpack.c.l.b16 %v625
    %v1145 = vunpack.c.l.b16 %v626
    %v1146 = vunpack.c.l.b16 %v627
    %v1147 = vunpack.c.l.b16 %v628
    %v1148 = vunpack.c.l.b16 %v629
    %v1149 = vunpack.c.l.b16 %v630
    %v1150 = vunpack.c.l.b16 %v631
    %v1151 = vunpack.c.l.b16 %v632
    %v1152 = vunpack.c.l.b16 %v633
    %v1153 = vunpack.c.l.b16 %v634
    %v1154 = vunpack.c.l.b16 %v635
    %v1155 = vunpack.c.l.b16 %v636
    %v1156 = vunpack.c.l.b16 %v637
    %v1157 = vunpack.c.l.b16 %v638
    %v1158 = vunpack.c.l.b16 %v639
    %v1159 = vunpack.c.l.b16 %v640
    %v1160 = vunpack.c.l.b16 %v641
    %v1161 = vunpack.c.l.b16 %v642
    %v1162 = vunpack.c.l.b16 %v643
    %v1163 = vunpack.c.l.b16 %v644
    %v1164 = vunpack.c.l.b16 %v645
    %v1165 = vunpack.c.l.b16 %v646
    %v1166 = vunpack.c.l.b16 %v647
    %v1167 = vunpack.c.l.b16 %v648
    %v1168 = vunpack.c.l.b16 %v649
    %v1169 = vunpack.c.l.b16 %v650
    %v1170 = vunpack.c.l.b16 %v651
    %v1171 = vunpack.c.l.b16 %v652
    %v1172 = vunpack.c.l.b16 %v653
    %v1173 = vunpack.c.l.b16 %v654
    %v1174 = vunpack.c.l.b16 %v655
    %v1175 = vunpack.c.l.b16 %v656
    %v1176 = vunpack.c.l.b16 %v657
    %v1177 = vunpack.c.l.b16 %v658
    %v1178 = vunpack.c.l.b16 %v659
    %v1179 = vunpack.c.l.b16 %v660
    %v1180 = vunpack.c.l.b16 %v661
    %v1181 = vunpack.c.l.b16 %v662
    %v1182 = vunpack.c.l.b16 %v663
    %v1183 = vunpack.c.l.b16 %v664
    %v1184 = vunpack.c.l.b16 %v665
    %v1185 = vunpack.c.l.b16 %v666
    %v1186 = vunpack.c.l.b16 %v667
    %v1187 = vunpack.c.l.b16 %v668
    %v1188 = vunpack.c.l.b16 %v669
    %v1189 = vunpack.c.l.b16 %v670
    %v1190 = vunpack.c.l.b16 %v671
    %v1191 = vunpack.c.l.b16 %v672
    %v1192 = vunpack.c.l.b16 %v673
    %v1193 = vunpack.c.l.b16 %v674
    %v1194 = vunpack.c.l.b16 %v675
    %v1195 = vunpack.c.l.b16 %v676
    %v1196 = vunpack.c.l.b16 %v677
    %v1197 = vunpack.c.l.b16 %v678
    %v1198 = vunpack.c.l.b16 %v679
    %v1199 = vunpack.c.l.b16 %v680
    %v1200 = vunpack.c.l.b16 %v681
    %v1201 = vunpack.c.l.b16 %v682
    %v1202 = vunpack.c.l.b16 %v683
    %v1203 = vunpack.c.l.b16 %v684
    %v1204 = vunpack.c.l.b16 %v685
    %v1205 = vunpack.c.l.b16 %v686
    %v1206 = vunpack.c.l.b16 %v687
    %v1207 = vunpack.c.l.b16 %v688
    %v1208 = vunpack.c.l.b16 %v689
    %v1209 = vunpack.c.l.b16 %v690
    %v1210 = vunpack.c.l.b16 %v691
    %v1211 = vunpack.c.l.b16 %v692
    %v1212 = vunpack.c.l.b16 %v693
    %v1213 = vunpack.c.l.b16 %v694
    %v1214 = vunpack.c.l.b16 %v695
    %v1215 = vunpack.c.l.b16 %v696
    %v1216 = vunpack.c.l.b16 %v697
    %v1217 = vunpack.c.l.b16 %v698
    %v1218 = vunpack.c.l.b16 %v699
    %v1219 = vunpack.c.l.b16 %v700
    %v1220 = vunpack.c.l.b16 %v701
    %v1221 = vunpack.c.l.b16 %v702
    %v1222 = vunpack.c.l.b16 %v703
    %v1223 = vunpack.c.l.b16 %v704
    %v1224 = vunpack.c.l.b16 %v705
    %v1225 = vunpack.c.l.b16 %v706
    %v1226 = vunpack.c.l.b16 %v707
    %v1227 = vunpack.c.l.b16 %v708
    %v1228 = vunpack.c.l.b16 %v709
    %v1229 = vunpack.c.l.b16 %v710
    %v1230 = vunpack.c.l.b16 %v711
    %v1231 = vunpack.c.l.b16 %v712
    %v1232 = vunpack.c.l.b16 %v713
    %v1233 = vunpack.c.l.b16 %v714
    %v1234 = vunpack.c.l.b16 %v715
    %v1235 = vunpack.c.l.b16 %v716
    %v1236 = vunpack.c.l.b16 %v717
    %v1237 = vunpack.c.l.b16 %v718
    %v1238 = vunpack.c.l.b16 %v719
    %v1239 = vunpack.c.l.b16 %v720
    %v1240 = vunpack.c.l.b16 %v721
    %v1241 = vunpack.c.l.b16 %v722
    %v1242 = vunpack.c.l.b16 %v723
    %v1243 = vunpack.c.l.b16 %v724
    %v1244 = vunpack.c.l.b16 %v725
    %v1245 = vunpack.c.l.b16 %v726
    %v1246 = vunpack.c.l.b16 %v727
    %v1247 = vunpack.c.l.b16 %v728
    %v1248 = vunpack.c.l.b16 %v729
    %v1249 = vunpack.c.l.b16 %v730
    %v1250 = vunpack.c.l.b16 %v731
    %v1251 = vunpack.c.l.b16 %v732
    %v1252 = vunpack.c.l.b16 %v733
    %v1253 = vunpack.c.l.b16 %v734
    %v1254 = vunpack.c.l.b16 %v735
    %v1255 = vunpack.c.l.b16 %v736
    %v1256 = vpack.c.b16 %v1001, %v1000
    %v1257 = vpack.c.b16 %v1003, %v1002
    %v1258 = vpack.c.b16 %v1005, %v1004
    %v1259 = vpack.c.b16 %v1007, %v1006
    %v1260 = vpack.c.b16 %v1009, %v1008
    %v1261 = vpack.c.b16 %v1011, %v1010
    %v1262 = vpack.c.b16 %v1013, %v1012
    %v1263 = vpack.c.b16 %v1015, %v1014
    %v1264 = vpack.c.b16 %v1017, %v1016
    %v1265 = vpack.c.b16 %v1019, %v1018
    %v1266 = vpack.c.b16 %v1021, %v1020
    %v1267 = vpack.c.b16 %v1023, %v1022
    %v1268 = vpack.c.b16 %v1025, %v1024
    %v1269 = vpack.c.b16 %v1027, %v1026
    %v1270 = vpack.c.b16 %v1029, %v1028
    %v1271 = vpack.c.b16 %v1031, %v1030
    %v1272 = vpack.c.b16 %v1033, %v1032
    %v1273 = vpack.c.b16 %v1035, %v1034
    %v1274 = vpack.c.b16 %v1037, %v1036
    %v1275 = vpack.c.b16 %v1039, %v1038
    %v1276 = vpack.c.b16 %v1041, %v1040
    %v1277 = vpack.c.b16 %v1043, %v1042
    %v1278 = vpack.c.b16 %v1045, %v1044
    %v1279 = vpack.c.b16 %v1047, %v1046
    %v1280 = vpack.c.b16 %v1049, %v1048
    %v1281 = vpack.c.b16 %v1051, %v1050
    %v1282 = vpack.c.b16 %v1053, %v1052
    %v1283 = vpack.c.b16 %v1055, %v1054
    %v1284 = vpack.c.b16 %v1057, %v1056
    %v1285 = vpack.c.b16 %v1059, %v1058
    %v1286 = vpack.c.b16 %v1061, %v1060
    %v1287 = vpack.c.b16 %v1063, %v1062
    %v1288 = vpack.c.b16 %v1065, %v1064
    %v1289 = vpack.c.b16 %v1067, %v1066
    %v1290 = vpack.c.b16 %v1069, %v1068
    %v1291 = vpack.c.b16 %v1071, %v1070
    %v1292 = vpack.c.b16 %v1073, %v1072
    %v1293 = vpack.c.b16 %v1075, %v1074
    %v1294 = vpack.c.b16 %v1077, %v1076
    %v1295 = vpack.c.b16 %v1079, %v1078
    %v1296 = vpack.c.b16 %v1081, %v1080
    %v1297 = vpack.c.b16 %v1083, %v1082
    %v1298 = vpack.c.b16 %v1085, %v1084
    %v1299 = vpack.c.b16 %v1087, %v1086
    %v1300 = vpack.c.b16 %v1089, %v1088
    %v1301 = vpack.c.b16 %v1091, %v1090
    %v1302 = vpack.c.b16 %v1093, %v1092
    %v1303 = vpack.c.b16 %v1095, %v1094
    %v1304 = vpack.c.b16 %v1097, %v1096
    %v1305 = vpack.c.b16 %v1099, %v1098
    %v1306 = vpack.c.b16 %v1101, %v1100
    %v1307 = vpack.c.b16 %v1103, %v1102
    %v1308 = vpack.c.b16 %v1105, %v1104
    %v1309 = vpack.c.b16 %v1107, %v1106
    %v1310 = vpack.c.b16 %v1109, %v1108
    %v1311 = vpack.c.b16 %v1111, %v1110
    %v1312 = vpack.c.b16 %v1113, %v1112
    %v1313 = vpack.c.b16 %v1115, %v1114
    %v1314 = vpack.c.b16 %v1117, %v1116
    %v1315 = vpack.c.b16 %v1119, %v1118
    %v1316 = vpack.c.b16 %v1121, %v1120
    %v1317 = vpack.c.b16 %v1123, %v1122
    %v1318 = vpack.c.b16 %v1125, %v1124
    %v1319 = vpack.c.b16 %v1127, %v1126
    %v1320 = vpack.c.b16 %v1129, %v1128
    %v1321 = vpack.c.b16 %v1131, %v1130
    %v1322 = vpack.c.b16 %v1133, %v1132
    %v1323 = vpack.c.b16 %v1135, %v1134
    %v1324 = vpack.c.b16 %v1137, %v1136
    %v1325 = vpack.c.b16 %v1139, %v1138
    %v1326 = vpack.c.b16 %v1141, %v1140
    %v1327 = vpack.c.b16 %v1143, %v1142
    %v1328 = vpack.c.b16 %v1145, %v1144
    %v1329 = vpack.c.b16 %v1147, %v1146
    %v1330 = vpack.c.b16 %v1149, %v1148
    %v1331 = vpack.c.b16 %v1151, %v1150
    %v1332 = vpack.c.b16 %v1153, %v1152
    %v1333 = vpack.c.b16 %v1155, %v1154
    %v1334 = vpack.c.b16 %v1157, %v1156
    %v1335 = vpack.c.b16 %v1159, %v1158
    %v1336 = vpack.c.b16 %v1161, %v1160
    %v1337 = vpack.c.b16 %v1163, %v1162
    %v1338 = vpack.c.b16 %v1165, %v1164
    %v1339 = vpack.c.b16 %v1167, %v1166
    %v1340 = vpack.c.b16 %v1169, %v1168
    %v1341 = vpack.c.b16 %v1171, %v1170
    %v1342 = vpack.c.b16 %v1173, %v1172
    %v1343 = vpack.c.b16 %v1175, %v1174
    %v1344 = vpack.c.b16 %v1177, %v1176
    %v1345 = vpack.c.b16 %v1179, %v1178
    %v1346 = vpack.c.b16 %v1181, %v1180
    %v1347 = vpack.c.b16 %v1183, %v1182
    %v1348 = vpack.c.b16 %v1185, %v1184
    %v1349 = vpack.c.b16 %v1187, %v1186
    %v1350 = vpack.c.b16 %v1189, %v1188
    %v1351 = vpack.c.b16 %v1191, %v1190
    %v1352 = vpack.c.b16 %v1193, %v1192
    %v1353 = vpack.c.b16 %v1195, %v1194
    %v1354 = vpack.c.b16 %v1197, %v1196
    %v1355 = vpack.c.b16 %v1199, %v1198
    %v1356 = vpack.c.b16 %v1201, %v1200
    %v1357 = vpack.c.b16 %v1203, %v1202
    %v1358 = vpack.c.b16 %v1205, %v1204
    %v1359 = vpack.c.b16 %v1207, %v1206
    %v1360 = vpack.c.b16 %v1209, %v1208
    %v1361 = vpack.c.b16 %v1211, %v1210
    %v1362 = vpack.c.b16 %v1213, %v1212
    %v1363 = vpack.c.b16 %v1215, %v1214
    %v1364 = vpack.c.b16 %v1217, %v1216
    %v1365 = vpack.c.b16 %v1219, %v1218
    %v1366 = vpack.c.b16 %v1221, %v1220
    %v1367 = vpack.c.b16 %v1223, %v1222
    %v1368 = vpack.c.b16 %v1225, %v1224
    %v1369 = vpack.c.b16 %v1227, %v1226
    %v1370 = vpack.c.b16 %v1229, %v1228
    %v1371 = vpack.c.b16 %v1231, %v1230
    %v1372 = vpack.c.b16 %v1233, %v1232
    %v1373 = vpack.c.b16 %v1235, %v1234
    %v1374 = vpack.c.b16 %v1237, %v1236
    %v1375 = vpack.c.b16 %v1239, %v1238
    %v1376 = vpack.c.b16 %v1241, %v1240
    %v1377 = vpack.c.b16 %v1243, %v1242
    %v1378 = vpack.c.b16 %v1245, %v1244
    %v1379 = vpack.c.b16 %v1247, %v1246
    %v1380 = vpack.c.b16 %v1249, %v1248
    %v1381 = vpack.c.b16 %v1251, %v1250
    %v1382 = vpack.c.b16 %v1253, %v1252
    %v1383 = vpack.c.b16 %v1255, %v1254
    %1512 = vmatprep.subr.bf16.mxu0 0
    %1513 = vmatpush1.bf16.msra.mxu0 %v1256
    %1514 = vmatprep.subr.bf16.mxu0 0
    %1515 = vmatpush1.bf16.msra.mxu0 %v1257
    %1516 = vmatprep.subr.bf16.mxu0 0
    %1517 = vmatpush1.bf16.msra.mxu0 %v1258
    %1518 = vmatprep.subr.bf16.mxu0 0
    %1519 = vmatpush1.bf16.msra.mxu0 %v1259
    %1520 = vmatprep.subr.bf16.mxu0 0
    %1521 = vmatpush1.bf16.msra.mxu0 %v1260
    %1522 = vmatprep.subr.bf16.mxu0 0
    %1523 = vmatpush1.bf16.msra.mxu0 %v1261
    %1524 = vmatprep.subr.bf16.mxu0 0
    %1525 = vmatpush1.bf16.msra.mxu0 %v1262
    %1526 = vmatprep.subr.bf16.mxu0 0
    %1527 = vmatpush1.bf16.msra.mxu0 %v1263
    %1528 = vmatprep.subr.bf16.mxu0 0
    %1529 = vmatpush1.bf16.msra.mxu0 %v1264
    %1530 = vmatprep.subr.bf16.mxu0 0
    %1531 = vmatpush1.bf16.msra.mxu0 %v1265
    %1532 = vmatprep.subr.bf16.mxu0 0
    %1533 = vmatpush1.bf16.msra.mxu0 %v1266
    %1534 = vmatprep.subr.bf16.mxu0 0
    %1535 = vmatpush1.bf16.msra.mxu0 %v1267
    %1536 = vmatprep.subr.bf16.mxu0 0
    %1537 = vmatpush1.bf16.msra.mxu0 %v1268
    %1538 = vmatprep.subr.bf16.mxu0 0
    %1539 = vmatpush1.bf16.msra.mxu0 %v1269
    %1540 = vmatprep.subr.bf16.mxu0 0
    %1541 = vmatpush1.bf16.msra.mxu0 %v1270
    %1542 = vmatprep.subr.bf16.mxu0 0
    %1543 = vmatpush1.bf16.msra.mxu0 %v1271
    %1544 = vmatprep.mubr.bf16.mxu0 %v466
    %1545 = vmatmul.mubr.bf16.gmra.mrb[0].mxu0 %v465
    %v1546 = vpop.f32.mrb[0].mxu0
    %v1547 = vadd.f32 %v742, %v1546
    %v1548 = vpop.f32.mrb[0].mxu0
    %v1549 = vpop.f32.mrb[0].mxu0
    %v1550 = vpop.f32.mrb[0].mxu0
    %1551 = vdwg.mxu0
    %1552 = vmatprep.subr.bf16.mxu0 0
    %1553 = vmatpush1.bf16.msra.mxu0 %v1272
    %1554 = vmatprep.subr.bf16.mxu0 0
    %1555 = vmatpush1.bf16.msra.mxu0 %v1273
    %1556 = vmatprep.subr.bf16.mxu0 0
    %1557 = vmatpush1.bf16.msra.mxu0 %v1274
    %1558 = vmatprep.subr.bf16.mxu0 0
    %1559 = vmatpush1.bf16.msra.mxu0 %v1275
    %1560 = vmatprep.subr.bf16.mxu0 0
    %1561 = vmatpush1.bf16.msra.mxu0 %v1276
    %1562 = vmatprep.subr.bf16.mxu0 0
    %1563 = vmatpush1.bf16.msra.mxu0 %v1277
    %1564 = vmatprep.subr.bf16.mxu0 0
    %1565 = vmatpush1.bf16.msra.mxu0 %v1278
    %1566 = vmatprep.subr.bf16.mxu0 0
    %1567 = vmatpush1.bf16.msra.mxu0 %v1279
    %1568 = vmatprep.subr.bf16.mxu0 0
    %1569 = vmatpush1.bf16.msra.mxu0 %v1280
    %1570 = vmatprep.subr.bf16.mxu0 0
    %1571 = vmatpush1.bf16.msra.mxu0 %v1281
    %1572 = vmatprep.subr.bf16.mxu0 0
    %1573 = vmatpush1.bf16.msra.mxu0 %v1282
    %1574 = vmatprep.subr.bf16.mxu0 0
    %1575 = vmatpush1.bf16.msra.mxu0 %v1283
    %1576 = vmatprep.subr.bf16.mxu0 0
    %1577 = vmatpush1.bf16.msra.mxu0 %v1284
    %1578 = vmatprep.subr.bf16.mxu0 0
    %1579 = vmatpush1.bf16.msra.mxu0 %v1285
    %1580 = vmatprep.subr.bf16.mxu0 0
    %1581 = vmatpush1.bf16.msra.mxu0 %v1286
    %1582 = vmatprep.subr.bf16.mxu0 0
    %1583 = vmatpush1.bf16.msra.mxu0 %v1287
    %1584 = vmatprep.mubr.bf16.mxu0 %v468
    %1585 = vmatmul.mubr.bf16.gmra.mrb[0].mxu0 %v467
    %v1586 = vpop.f32.mrb[0].mxu0
    %v1587 = vadd.f32 %v1547, %v1586
    %v1588 = vpop.f32.mrb[0].mxu0
    %v1589 = vpop.f32.mrb[0].mxu0
    %v1590 = vpop.f32.mrb[0].mxu0
    %1591 = vdwg.mxu0
    %1592 = vmatprep.subr.bf16.mxu0 0
    %1593 = vmatpush1.bf16.msra.mxu0 %v1288
    %1594 = vmatprep.subr.bf16.mxu0 0
    %1595 = vmatpush1.bf16.msra.mxu0 %v1289
    %1596 = vmatprep.subr.bf16.mxu0 0
    %1597 = vmatpush1.bf16.msra.mxu0 %v1290
    %1598 = vmatprep.subr.bf16.mxu0 0
    %1599 = vmatpush1.bf16.msra.mxu0 %v1291
    %1600 = vmatprep.subr.bf16.mxu0 0
    %1601 = vmatpush1.bf16.msra.mxu0 %v1292
    %1602 = vmatprep.subr.bf16.mxu0 0
    %1603 = vmatpush1.bf16.msra.mxu0 %v1293
    %1604 = vmatprep.subr.bf16.mxu0 0
    %1605 = vmatpush1.bf16.msra.mxu0 %v1294
    %1606 = vmatprep.subr.bf16.mxu0 0
    %1607 = vmatpush1.bf16.msra.mxu0 %v1295
    %1608 = vmatprep.subr.bf16.mxu0 0
    %1609 = vmatpush1.bf16.msra.mxu0 %v1296
    %1610 = vmatprep.subr.bf16.mxu0 0
    %1611 = vmatpush1.bf16.msra.mxu0 %v1297
    %1612 = vmatprep.subr.bf16.mxu0 0
    %1613 = vmatpush1.bf16.msra.mxu0 %v1298
    %1614 = vmatprep.subr.bf16.mxu0 0
    %1615 = vmatpush1.bf16.msra.mxu0 %v1299
    %1616 = vmatprep.subr.bf16.mxu0 0
    %1617 = vmatpush1.bf16.msra.mxu0 %v1300
    %1618 = vmatprep.subr.bf16.mxu0 0
    %1619 = vmatpush1.bf16.msra.mxu0 %v1301
    %1620 = vmatprep.subr.bf16.mxu0 0
    %1621 = vmatpush1.bf16.msra.mxu0 %v1302
    %1622 = vmatprep.subr.bf16.mxu0 0
    %1623 = vmatpush1.bf16.msra.mxu0 %v1303
    %1624 = vmatprep.mubr.bf16.mxu0 %v470
    %1625 = vmatmul.mubr.bf16.gmra.mrb[0].mxu0 %v469
    %v1626 = vpop.f32.mrb[0].mxu0
    %v1627 = vadd.f32 %v1587, %v1626
    %v1628 = vpop.f32.mrb[0].mxu0
    %v1629 = vpop.f32.mrb[0].mxu0
    %v1630 = vpop.f32.mrb[0].mxu0
    %1631 = vdwg.mxu0
    %1632 = vmatprep.subr.bf16.mxu0 0
    %1633 = vmatpush1.bf16.msra.mxu0 %v1304
    %1634 = vmatprep.subr.bf16.mxu0 0
    %1635 = vmatpush1.bf16.msra.mxu0 %v1305
    %1636 = vmatprep.subr.bf16.mxu0 0
    %1637 = vmatpush1.bf16.msra.mxu0 %v1306
    %1638 = vmatprep.subr.bf16.mxu0 0
    %1639 = vmatpush1.bf16.msra.mxu0 %v1307
    %1640 = vmatprep.subr.bf16.mxu0 0
    %1641 = vmatpush1.bf16.msra.mxu0 %v1308
    %1642 = vmatprep.subr.bf16.mxu0 0
    %1643 = vmatpush1.bf16.msra.mxu0 %v1309
    %1644 = vmatprep.subr.bf16.mxu0 0
    %1645 = vmatpush1.bf16.msra.mxu0 %v1310
    %1646 = vmatprep.subr.bf16.mxu0 0
    %1647 = vmatpush1.bf16.msra.mxu0 %v1311
    %1648 = vmatprep.subr.bf16.mxu0 0
    %1649 = vmatpush1.bf16.msra.mxu0 %v1312
    %1650 = vmatprep.subr.bf16.mxu0 0
    %1651 = vmatpush1.bf16.msra.mxu0 %v1313
    %1652 = vmatprep.subr.bf16.mxu0 0
    %1653 = vmatpush1.bf16.msra.mxu0 %v1314
    %1654 = vmatprep.subr.bf16.mxu0 0
    %1655 = vmatpush1.bf16.msra.mxu0 %v1315
    %1656 = vmatprep.subr.bf16.mxu0 0
    %1657 = vmatpush1.bf16.msra.mxu0 %v1316
    %1658 = vmatprep.subr.bf16.mxu0 0
    %1659 = vmatpush1.bf16.msra.mxu0 %v1317
    %1660 = vmatprep.subr.bf16.mxu0 0
    %1661 = vmatpush1.bf16.msra.mxu0 %v1318
    %1662 = vmatprep.subr.bf16.mxu0 0
    %1663 = vmatpush1.bf16.msra.mxu0 %v1319
    %1664 = vmatprep.mubr.bf16.mxu0 %v472
    %1665 = vmatmul.mubr.bf16.gmra.mrb[0].mxu0 %v471
    %v1666 = vpop.f32.mrb[0].mxu0
    %v1667 = vadd.f32 %v1627, %v1666
    %v1668 = vpop.f32.mrb[0].mxu0
    %v1669 = vpop.f32.mrb[0].mxu0
    %v1670 = vpop.f32.mrb[0].mxu0
    %1671 = vdwg.mxu0
    %1672 = vmatprep.subr.bf16.mxu0 0
    %1673 = vmatpush1.bf16.msra.mxu0 %v1320
    %1674 = vmatprep.subr.bf16.mxu0 0
    %1675 = vmatpush1.bf16.msra.mxu0 %v1321
    %1676 = vmatprep.subr.bf16.mxu0 0
    %1677 = vmatpush1.bf16.msra.mxu0 %v1322
    %1678 = vmatprep.subr.bf16.mxu0 0
    %1679 = vmatpush1.bf16.msra.mxu0 %v1323
    %1680 = vmatprep.subr.bf16.mxu0 0
    %1681 = vmatpush1.bf16.msra.mxu0 %v1324
    %1682 = vmatprep.subr.bf16.mxu0 0
    %1683 = vmatpush1.bf16.msra.mxu0 %v1325
    %1684 = vmatprep.subr.bf16.mxu0 0
    %1685 = vmatpush1.bf16.msra.mxu0 %v1326
    %1686 = vmatprep.subr.bf16.mxu0 0
    %1687 = vmatpush1.bf16.msra.mxu0 %v1327
    %1688 = vmatprep.subr.bf16.mxu0 0
    %1689 = vmatpush1.bf16.msra.mxu0 %v1328
    %1690 = vmatprep.subr.bf16.mxu0 0
    %1691 = vmatpush1.bf16.msra.mxu0 %v1329
    %1692 = vmatprep.subr.bf16.mxu0 0
    %1693 = vmatpush1.bf16.msra.mxu0 %v1330
    %1694 = vmatprep.subr.bf16.mxu0 0
    %1695 = vmatpush1.bf16.msra.mxu0 %v1331
    %1696 = vmatprep.subr.bf16.mxu0 0
    %1697 = vmatpush1.bf16.msra.mxu0 %v1332
    %1698 = vmatprep.subr.bf16.mxu0 0
    %1699 = vmatpush1.bf16.msra.mxu0 %v1333
    %1700 = vmatprep.subr.bf16.mxu0 0
    %1701 = vmatpush1.bf16.msra.mxu0 %v1334
    %1702 = vmatprep.subr.bf16.mxu0 0
    %1703 = vmatpush1.bf16.msra.mxu0 %v1335
    %1704 = vmatprep.mubr.bf16.mxu0 %v474
    %1705 = vmatmul.mubr.bf16.gmra.mrb[0].mxu0 %v473
    %v1706 = vpop.f32.mrb[0].mxu0
    %v1707 = vadd.f32 %v1667, %v1706
    %v1708 = vpop.f32.mrb[0].mxu0
    %v1709 = vpop.f32.mrb[0].mxu0
    %v1710 = vpop.f32.mrb[0].mxu0
    %1711 = vdwg.mxu0
    %1712 = vmatprep.subr.bf16.mxu0 0
    %1713 = vmatpush1.bf16.msra.mxu0 %v1336
    %1714 = vmatprep.subr.bf16.mxu0 0
    %1715 = vmatpush1.bf16.msra.mxu0 %v1337
    %1716 = vmatprep.subr.bf16.mxu0 0
    %1717 = vmatpush1.bf16.msra.mxu0 %v1338
    %1718 = vmatprep.subr.bf16.mxu0 0
    %1719 = vmatpush1.bf16.msra.mxu0 %v1339
    %1720 = vmatprep.subr.bf16.mxu0 0
    %1721 = vmatpush1.bf16.msra.mxu0 %v1340
    %1722 = vmatprep.subr.bf16.mxu0 0
    %1723 = vmatpush1.bf16.msra.mxu0 %v1341
    %1724 = vmatprep.subr.bf16.mxu0 0
    %1725 = vmatpush1.bf16.msra.mxu0 %v1342
    %1726 = vmatprep.subr.bf16.mxu0 0
    %1727 = vmatpush1.bf16.msra.mxu0 %v1343
    %1728 = vmatprep.subr.bf16.mxu0 0
    %1729 = vmatpush1.bf16.msra.mxu0 %v1344
    %1730 = vmatprep.subr.bf16.mxu0 0
    %1731 = vmatpush1.bf16.msra.mxu0 %v1345
    %1732 = vmatprep.subr.bf16.mxu0 0
    %1733 = vmatpush1.bf16.msra.mxu0 %v1346
    %1734 = vmatprep.subr.bf16.mxu0 0
    %1735 = vmatpush1.bf16.msra.mxu0 %v1347
    %1736 = vmatprep.subr.bf16.mxu0 0
    %1737 = vmatpush1.bf16.msra.mxu0 %v1348
    %1738 = vmatprep.subr.bf16.mxu0 0
    %1739 = vmatpush1.bf16.msra.mxu0 %v1349
    %1740 = vmatprep.subr.bf16.mxu0 0
    %1741 = vmatpush1.bf16.msra.mxu0 %v1350
    %1742 = vmatprep.subr.bf16.mxu0 0
    %1743 = vmatpush1.bf16.msra.mxu0 %v1351
    %1744 = vmatprep.mubr.bf16.mxu0 %v476
    %1745 = vmatmul.mubr.bf16.gmra.mrb[0].mxu0 %v475
    %v1746 = vpop.f32.mrb[0].mxu0
    %v1747 = vadd.f32 %v1707, %v1746
    %v1748 = vpop.f32.mrb[0].mxu0
    %v1749 = vpop.f32.mrb[0].mxu0
    %v1750 = vpop.f32.mrb[0].mxu0
    %1751 = vdwg.mxu0
    %1752 = vmatprep.subr.bf16.mxu0 0
    %1753 = vmatpush1.bf16.msra.mxu0 %v1352
    %1754 = vmatprep.subr.bf16.mxu0 0
    %1755 = vmatpush1.bf16.msra.mxu0 %v1353
    %1756 = vmatprep.subr.bf16.mxu0 0
    %1757 = vmatpush1.bf16.msra.mxu0 %v1354
    %1758 = vmatprep.subr.bf16.mxu0 0
    %1759 = vmatpush1.bf16.msra.mxu0 %v1355
    %1760 = vmatprep.subr.bf16.mxu0 0
    %1761 = vmatpush1.bf16.msra.mxu0 %v1356
    %1762 = vmatprep.subr.bf16.mxu0 0
    %1763 = vmatpush1.bf16.msra.mxu0 %v1357
    %1764 = vmatprep.subr.bf16.mxu0 0
    %1765 = vmatpush1.bf16.msra.mxu0 %v1358
    %1766 = vmatprep.subr.bf16.mxu0 0
    %1767 = vmatpush1.bf16.msra.mxu0 %v1359
    %1768 = vmatprep.subr.bf16.mxu0 0
    %1769 = vmatpush1.bf16.msra.mxu0 %v1360
    %1770 = vmatprep.subr.bf16.mxu0 0
    %1771 = vmatpush1.bf16.msra.mxu0 %v1361
    %1772 = vmatprep.subr.bf16.mxu0 0
    %1773 = vmatpush1.bf16.msra.mxu0 %v1362
    %1774 = vmatprep.subr.bf16.mxu0 0
    %1775 = vmatpush1.bf16.msra.mxu0 %v1363
    %1776 = vmatprep.subr.bf16.mxu0 0
    %1777 = vmatpush1.bf16.msra.mxu0 %v1364
    %1778 = vmatprep.subr.bf16.mxu0 0
    %1779 = vmatpush1.bf16.msra.mxu0 %v1365
    %1780 = vmatprep.subr.bf16.mxu0 0
    %1781 = vmatpush1.bf16.msra.mxu0 %v1366
    %1782 = vmatprep.subr.bf16.mxu0 0
    %1783 = vmatpush1.bf16.msra.mxu0 %v1367
    %1784 = vmatprep.mubr.bf16.mxu0 %v478
    %1785 = vmatmul.mubr.bf16.gmra.mrb[0].mxu0 %v477
    %v1786 = vpop.f32.mrb[0].mxu0
    %v1787 = vadd.f32 %v1747, %v1786
    %v1788 = vpop.f32.mrb[0].mxu0
    %v1789 = vpop.f32.mrb[0].mxu0
    %v1790 = vpop.f32.mrb[0].mxu0
    %1791 = vdwg.mxu0
    %1792 = vmatprep.subr.bf16.mxu0 0
    %1793 = vmatpush1.bf16.msra.mxu0 %v1368
    %1794 = vmatprep.subr.bf16.mxu0 0
    %1795 = vmatpush1.bf16.msra.mxu0 %v1369
    %1796 = vmatprep.subr.bf16.mxu0 0
    %1797 = vmatpush1.bf16.msra.mxu0 %v1370
    %1798 = vmatprep.subr.bf16.mxu0 0
    %1799 = vmatpush1.bf16.msra.mxu0 %v1371
    %1800 = vmatprep.subr.bf16.mxu0 0
    %1801 = vmatpush1.bf16.msra.mxu0 %v1372
    %1802 = vmatprep.subr.bf16.mxu0 0
    %1803 = vmatpush1.bf16.msra.mxu0 %v1373
    %1804 = vmatprep.subr.bf16.mxu0 0
    %1805 = vmatpush1.bf16.msra.mxu0 %v1374
    %1806 = vmatprep.subr.bf16.mxu0 0
    %1807 = vmatpush1.bf16.msra.mxu0 %v1375
    %1808 = vmatprep.subr.bf16.mxu0 0
    %1809 = vmatpush1.bf16.msra.mxu0 %v1376
    %1810 = vmatprep.subr.bf16.mxu0 0
    %1811 = vmatpush1.bf16.msra.mxu0 %v1377
    %1812 = vmatprep.subr.bf16.mxu0 0
    %1813 = vmatpush1.bf16.msra.mxu0 %v1378
    %1814 = vmatprep.subr.bf16.mxu0 0
    %1815 = vmatpush1.bf16.msra.mxu0 %v1379
    %1816 = vmatprep.subr.bf16.mxu0 0
    %1817 = vmatpush1.bf16.msra.mxu0 %v1380
    %1818 = vmatprep.subr.bf16.mxu0 0
    %1819 = vmatpush1.bf16.msra.mxu0 %v1381
    %1820 = vmatprep.subr.bf16.mxu0 0
    %1821 = vmatpush1.bf16.msra.mxu0 %v1382
    %1822 = vmatprep.subr.bf16.mxu0 0
    %1823 = vmatpush1.bf16.msra.mxu0 %v1383
    %1824 = vmatprep.mubr.bf16.mxu0 %v480
    %1825 = vmatmul.mubr.bf16.gmra.mrb[0].mxu0 %v479
    %v1826 = vpop.f32.mrb[0].mxu0
    %v1827 = vadd.f32 %v1787, %v1826
    %v1828 = vpop.f32.mrb[0].mxu0
    %v1829 = vpop.f32.mrb[0].mxu0
    %v1830 = vpop.f32.mrb[0].mxu0
    %1831 = vdwg.mxu0
    %v1832 = vmax.f32 %v1827, 0.0
    %v1833 = vpack.c.bf16 %v1832, %v1832
    %v1834 = vld [vmem:[%s5] sm:$0xf]
    %v1835 = vld [vmem:[%s5 + $0x4] sm:$0xf]
    %v1836 = vld [vmem:[%s5 + $0x8] sm:$0xf]
    %v1837 = vld [vmem:[%s5 + $0xc] sm:$0xf]
    %v1838 = vld [vmem:[%s5 + $0x10] sm:$0xf]
    %v1839 = vld [vmem:[%s5 + $0x14] sm:$0xf]
    %v1840 = vld [vmem:[%s5 + $0x18] sm:$0xf]
    %v1841 = vld [vmem:[%s5 + $0x1c] sm:$0xf]
    %v1842 = vld [vmem:[%s6] sm:$0x1]
    %v1844 = vlaneseq
    %v1845 = vshrl.u32 %v1844, 7
    %v1846 = vsub.s32 0, %v1845
    %v1847 = vrot.slane %v1842, %v1846
    %v1857 = vunpack.c.l.b16 %v1834
    %v1858 = vunpack.c.l.b16 %v1835
    %v1859 = vunpack.c.l.b16 %v1836
    %v1860 = vunpack.c.l.b16 %v1837
    %v1861 = vunpack.c.l.b16 %v1838
    %v1862 = vunpack.c.l.b16 %v1839
    %v1863 = vunpack.c.l.b16 %v1840
    %v1864 = vunpack.c.l.b16 %v1841
    %v1865 = vpack.c.b16 %v1858, %v1857
    %v1866 = vpack.c.b16 %v1860, %v1859
    %v1867 = vpack.c.b16 %v1862, %v1861
    %v1868 = vpack.c.b16 %v1864, %v1863
    %vm1873 = vcmask 523264
    %v1875 = vsel %vm1873, %v1833, 0
    %1877 = vmatprep.subr.bf16.mxu0 0
    %1878 = vmatpush1.bf16.msra.mxu0 %v1865
    %1879 = vmatprep.subr.bf16.mxu0 0
    %1880 = vmatpush1.bf16.msra.mxu0 %v1866
    %1881 = vmatprep.subr.bf16.mxu0 0
    %1882 = vmatpush1.bf16.msra.mxu0 %v1867
    %1883 = vmatprep.subr.bf16.mxu0 0
    %1884 = vmatpush1.bf16.msra.mxu0 %v1868
    %1885 = vmatprep.subr.bf16.mxu0 0
    %1886 = vmatpush1.bf16.msra.mxu0 0
    %1887 = vmatprep.subr.bf16.mxu0 0
    %1888 = vmatpush1.bf16.msra.mxu0 0
    %1889 = vmatprep.subr.bf16.mxu0 0
    %1890 = vmatpush1.bf16.msra.mxu0 0
    %1891 = vmatprep.subr.bf16.mxu0 0
    %1892 = vmatpush1.bf16.msra.mxu0 0
    %1893 = vmatprep.subr.bf16.mxu0 0
    %1894 = vmatpush1.bf16.msra.mxu0 0
    %1895 = vmatprep.subr.bf16.mxu0 0
    %1896 = vmatpush1.bf16.msra.mxu0 0
    %1897 = vmatprep.subr.bf16.mxu0 0
    %1898 = vmatpush1.bf16.msra.mxu0 0
    %1899 = vmatprep.subr.bf16.mxu0 0
    %1900 = vmatpush1.bf16.msra.mxu0 0
    %1901 = vmatprep.subr.bf16.mxu0 0
    %1902 = vmatpush1.bf16.msra.mxu0 0
    %1903 = vmatprep.subr.bf16.mxu0 0
    %1904 = vmatpush1.bf16.msra.mxu0 0
    %1905 = vmatprep.subr.bf16.mxu0 0
    %1906 = vmatpush1.bf16.msra.mxu0 0
    %1907 = vmatprep.subr.bf16.mxu0 0
    %1908 = vmatpush1.bf16.msra.mxu0 0
    %1909 = vmatprep.mubr.bf16.mxu0 0
    %1910 = vmatmul.mubr.bf16.gmra.mrb[0].mxu0 %v1875
    %v1911 = vpop.f32.mrb[0].mxu0
    %v1912 = vadd.f32 %v1847, %v1911
    %v1913 = vpop.f32.mrb[0].mxu0
    %v1914 = vpop.f32.mrb[0].mxu0
    %v1915 = vpop.f32.mrb[0].mxu0
    %1916 = vdwg.mxu0
    %1917 = vst [vmem:[#allocation3] sm:$0x3] %v1912
    // Predicated region
    $region30: #{_fused_forward.1} parent=1 // pred_check
      _
    $region31: #{_fused_forward.1} parent=1 // pred_check_branch
      %1919 = sbr.rel (0) target = $region33
    $region32: #{_fused_forward.1} parent=1 // pred_region
      %s1921 = ssub.s32 32, 32
      %1922 = vsyncadd [#allocation4], %s1921
      %s1924 = sshll.u32 [#allocation3], 4
      %s1925 = int_to_ptr.vmem [resolvable:$true] %s1924
      %1927 = dma.vmem_to_hbm [thread:$0]  %s1925, 32, %s7, [#allocation4]
    $region33: #{_fused_forward.1} parent=1 // pred_fallthru
      _
    // Predicated region
    $region34: #{_fused_forward.1} parent=1 // pred_check
      _
    $region35: #{_fused_forward.1} parent=1 // pred_check_branch
      %1929 = sbr.rel (0) target = $region37
    $region36: #{_fused_forward.1} parent=1 // pred_region
      %1930 = dma.done [#allocation4], 32
    $region37: #{_fused_forward.1} parent=1 // pred_fallthru
      _
    %1931 = vsyncpa [#allocation4], 1

</llo_original>
